<compile_context>
chip_gen: v5e
topology: v5e:2x2
jax: 0.10.0
libtpu: 0.0.40
codegen_flags: <defaults>
</compile_context>

<pallas_src>
import numpy as np
import jax
import jax.numpy as jnp
from jax import lax
from jax.experimental import pallas as pl
from jax.experimental.pallas import tpu as pltpu

# ---------------------------------------------------------------------------
# Static shape constants (implied by fc1 = 16*6*6 -> 1x32x32 input)
# ---------------------------------------------------------------------------
C1P = 8                     # conv1 out channels padded 6 -> 8
C2 = 16                     # conv2 out channels
H1, W1 = 30, 30             # conv1 output spatial (valid 3x3 on 32x32)
P1H, P1W = 15, 15           # after pool1
H2, W2 = 13, 13             # conv2 output spatial
P2H, P2W = 6, 6             # after pool2 (floor mode, row/col 12 dropped)
L1 = W1 * C1P               # 240 lanes: conv1 slab (w*8 + c)
L1P = P1W * C1P             # 120 lanes: pool1 slab
L2 = W2 * C2                # 208 lanes: conv2 slab (w*16 + c)
L2P = P2W * C2              # 96  lanes: pool2 slab == (h,w,c) flatten row
FC1, FC2, FC3 = 128, 128, 10  # fc hidden dims padded 120->128, 84->128


# ---------------------------------------------------------------------------
# Fused kernel: conv1+ReLU+pool1 -> conv2+ReLU+pool2 -> fc1 -> fc2 -> fc3
# One image per grid step; everything stays in VMEM.
# ---------------------------------------------------------------------------
def _net_kernel(x_ref, t1_ref, b1_ref, re1_ref, ro1_ref, ce1_ref, co1_ref,
                t2_ref, b2_ref, re2_ref, ro2_ref, ce2_ref, co2_ref,
                wf1_ref, bf1_ref, wf2_ref, bf2_ref, wf3_ref, bf3_ref, o_ref):
    f32 = jnp.float32

    def dot(a, b):
        return jnp.dot(a, b, preferred_element_type=f32)

    x = x_ref[0]                                        # (32, 32)

    # ---- conv1 (1->6 ch, 3x3 valid): 3 row-tap matmuls, lane-merged output --
    acc1 = jnp.zeros((H1, L1), f32)
    for i in range(3):
        acc1 = acc1 + dot(x[i:i + H1, :], t1_ref[i])    # (30,32)@(32,240)
    h1 = jnp.maximum(acc1 + b1_ref[...], 0.0)           # (30, 240)

    # ---- pool1 2x2/2: row pair-max (left selects) + col pair-max+compaction -
    rmax1 = jnp.maximum(dot(re1_ref[...], h1), dot(ro1_ref[...], h1))  # (15,240)
    p1 = jnp.maximum(dot(rmax1, ce1_ref[...]), dot(rmax1, co1_ref[...]))
    # p1: (15, 120) = 15 rows x (15 cols * 8 ch)

    # ---- conv2 (6->16 ch, 3x3 valid): 3 row-tap matmuls ---------------------
    acc2 = jnp.zeros((H2, L2), f32)
    for i in range(3):
        acc2 = acc2 + dot(p1[i:i + H2, :], t2_ref[i])   # (13,120)@(120,208)
    h2 = jnp.maximum(acc2 + b2_ref[...], 0.0)           # (13, 208)

    # ---- pool2 2x2/2 (floor: row/col 12 dropped by the selection matrices) --
    rmax2 = jnp.maximum(dot(re2_ref[...], h2), dot(ro2_ref[...], h2))  # (6,208)
    p2 = jnp.maximum(dot(rmax2, ce2_ref[...]), dot(rmax2, co2_ref[...]))
    # p2: (6, 96) = rows h x lanes (w*16 + c)  == NHWC flatten of (6,6,16)

    # ---- fc1 (576->128 padded) as 6 accumulated row matmuls, then ReLU ------
    h3 = bf1_ref[...]                                   # (1, 128)
    for r in range(P2H):
        h3 = h3 + dot(p2[r:r + 1, :], wf1_ref[r])       # (1,96)@(96,128)
    h3 = jnp.maximum(h3, 0.0)

    # ---- fc2 (128->128 padded) + ReLU, fc3 (->10) ---------------------------
    h4 = jnp.maximum(dot(h3, wf2_ref[...]) + bf2_ref[...], 0.0)
    logits = dot(h4, wf3_ref[...]) + bf3_ref[...]       # (1, 10)
    o_ref[0] = logits.astype(o_ref.dtype)


def net_forward(x_nchw, q):
    B = x_nchw.shape[0]
    x = x_nchw.reshape(B, 32, 32).astype(jnp.float32)   # drop the size-1 channel

    def c2d(shape):   # full-block constant, 2-D
        return pl.BlockSpec(shape, lambda b: (0, 0))

    def c3d(shape):   # full-block constant, 3-D
        return pl.BlockSpec(shape, lambda b: (0, 0, 0))

    out = pl.pallas_call(
        _net_kernel,
        out_shape=jax.ShapeDtypeStruct((B, 1, FC3), jnp.float32),
        grid=(B,),   # one image / step; B=2 -> 2 parallel steps (v7x: 2 cores)
        in_specs=[
            pl.BlockSpec((1, 32, 32), lambda b: (b, 0, 0)),   # image
            c3d((3, 32, L1)),        # conv1 row-tap matrices
            c2d((1, L1)),            # conv1 bias (tiled per column)
            c2d((P1H, H1)),          # pool1 even-row select
            c2d((P1H, H1)),          # pool1 odd-row select
            c2d((L1, L1P)),          # pool1 even-col compaction
            c2d((L1, L1P)),          # pool1 odd-col compaction
            c3d((3, L1P, L2)),       # conv2 row-tap matrices
            c2d((1, L2)),            # conv2 bias (tiled)
            c2d((P2H, H2)),          # pool2 even-row select
            c2d((P2H, H2)),          # pool2 odd-row select
            c2d((L2, L2P)),          # pool2 even-col compaction
            c2d((L2, L2P)),          # pool2 odd-col compaction
            c3d((P2H, L2P, FC1)),    # fc1 weights (h, w*16+c, o)
            c2d((1, FC1)),           # fc1 bias (padded)
            c2d((FC1, FC2)),         # fc2 weights (padded)
            c2d((1, FC2)),           # fc2 bias (padded)
            c2d((FC2, FC3)),         # fc3 weights
            c2d((1, FC3)),           # fc3 bias
        ],
        out_specs=pl.BlockSpec((1, 1, FC3), lambda b: (b, 0, 0)),
        compiler_params=pltpu.CompilerParams(
            dimension_semantics=("parallel",)),
    )(x, q["t1"], q["b1r"], q["re1"], q["ro1"], q["ce1"], q["co1"],
      q["t2"], q["b2r"], q["re2"], q["ro2"], q["ce2"], q["co2"],
      q["wf1"], q["bf1"], q["wf2"], q["bf2"], q["wf3"], q["bf3"])
    return out.reshape(B, FC3)


# ---------------------------------------------------------------------------
# Synthetic parameters (PyTorch-layout shapes) + one-time layout prep
# ---------------------------------------------------------------------------
def init_params(key):
    ks = jax.random.split(key, 10)
    return {
        "conv1_w": jax.random.normal(ks[0], (6, 1, 3, 3), jnp.float32) * 0.1,
        "conv1_b": jax.random.normal(ks[1], (6,), jnp.float32) * 0.1,
        "conv2_w": jax.random.normal(ks[2], (16, 6, 3, 3), jnp.float32) * 0.1,
        "conv2_b": jax.random.normal(ks[3], (16,), jnp.float32) * 0.1,
        "fc1_w": jax.random.normal(ks[4], (120, 16 * 6 * 6), jnp.float32) * 0.05,
        "fc1_b": jax.random.normal(ks[5], (120,), jnp.float32) * 0.05,
        "fc2_w": jax.random.normal(ks[6], (84, 120), jnp.float32) * 0.05,
        "fc2_b": jax.random.normal(ks[7], (84,), jnp.float32) * 0.05,
        "fc3_w": jax.random.normal(ks[8], (10, 84), jnp.float32) * 0.05,
        "fc3_b": jax.random.normal(ks[9], (10,), jnp.float32) * 0.05,
    }


def _pool_selectors(h_in, h_out, w_in, w_out, c):
    """0/1 selection matrices for a 2x2/stride-2 max pool on a (rows, W*c) slab."""
    re = np.zeros((h_out, h_in), np.float32)
    ro = np.zeros((h_out, h_in), np.float32)
    for r in range(h_out):
        re[r, 2 * r] = 1.0
        ro[r, 2 * r + 1] = 1.0
    ce = np.zeros((w_in * c, w_out * c), np.float32)
    co = np.zeros((w_in * c, w_out * c), np.float32)
    eye = np.eye(c, dtype=np.float32)
    for w in range(w_out):
        ce[2 * w * c:(2 * w + 1) * c, w * c:(w + 1) * c] = eye
        co[(2 * w + 1) * c:(2 * w + 2) * c, w * c:(w + 1) * c] = eye
    return re, ro, ce, co


def prepare_params(p):
    """One-time weight relayout + constant-matrix construction (init, not fwd)."""
    w1 = np.asarray(p["conv1_w"], np.float32)          # (6, 1, 3, 3)
    b1 = np.asarray(p["conv1_b"], np.float32)
    w2 = np.asarray(p["conv2_w"], np.float32)          # (16, 6, 3, 3)
    b2 = np.asarray(p["conv2_b"], np.float32)

    # conv1 row-tap matrices: (x[i:i+30,:] @ t1[i])[h, w*8+c] = sum_j x[h+i,w+j]*w1[c,0,i,j]
    t1 = np.zeros((3, 32, L1), np.float32)
    for i in range(3):
        for j in range(3):
            for w in range(W1):
                t1[i, w + j, w * C1P:w * C1P + 6] = w1[:, 0, i, j]
    b1r = np.tile(np.pad(b1, (0, C1P - 6)), W1).reshape(1, L1)

    # conv2 row-tap matrices on the lane-merged pooled slab (lane = w*8 + ci)
    t2 = np.zeros((3, L1P, L2), np.float32)
    for i in range(3):
        for j in range(3):
            for w in range(W2):
                for ci in range(6):
                    t2[i, (w + j) * C1P + ci, w * C2:(w + 1) * C2] = w2[:, ci, i, j]
    b2r = np.tile(b2, W2).reshape(1, L2)

    re1, ro1, ce1, co1 = _pool_selectors(H1, P1H, W1, P1W, C1P)
    re2, ro2, ce2, co2 = _pool_selectors(H2, P2H, W2, P2W, C2)

    # fc1: permute inputs from torch's (c,h,w) flatten to the kernel's
    # (h, w*16+c) layout; split h out for 6 accumulated row matmuls; pad 120->128.
    f1 = np.asarray(p["fc1_w"], np.float32).reshape(120, 16, 6, 6)   # (o,c,h,w)
    f1 = np.transpose(f1, (2, 3, 1, 0)).reshape(P2H, L2P, 120)       # (h, w*16+c, o)
    wf1 = np.pad(f1, ((0, 0), (0, 0), (0, FC1 - 120)))
    bf1 = np.pad(np.asarray(p["fc1_b"], np.float32), (0, FC1 - 120)).reshape(1, FC1)
    wf2 = np.pad(np.asarray(p["fc2_w"], np.float32).T,
                 ((0, FC1 - 120), (0, FC2 - 84)))                    # (128, 128)
    bf2 = np.pad(np.asarray(p["fc2_b"], np.float32), (0, FC2 - 84)).reshape(1, FC2)
    wf3 = np.pad(np.asarray(p["fc3_w"], np.float32).T, ((0, FC2 - 84), (0, 0)))
    bf3 = np.asarray(p["fc3_b"], np.float32).reshape(1, FC3)

    consts = dict(t1=t1, b1r=b1r, t2=t2, b2r=b2r,
                  re1=re1, ro1=ro1, ce1=ce1, co1=co1,
                  re2=re2, ro2=ro2, ce2=ce2, co2=co2,
                  wf1=wf1, bf1=bf1, wf2=wf2, bf2=bf2, wf3=wf3, bf3=bf3)
    return {k: jnp.asarray(v) for k, v in consts.items()}


# ---------------------------------------------------------------------------
# Pure-JAX reference (mirrors the PyTorch module) for a correctness check
# ---------------------------------------------------------------------------
def net_reference(x, p):
    y = lax.conv_general_dilated(x, p["conv1_w"], (1, 1), "VALID",
                                 dimension_numbers=("NCHW", "OIHW", "NCHW"))
    y = jnp.maximum(y + p["conv1_b"][None, :, None, None], 0.0)
    y = lax.reduce_window(y, -jnp.inf, lax.max, (1, 1, 2, 2), (1, 1, 2, 2), "VALID")
    y = lax.conv_general_dilated(y, p["conv2_w"], (1, 1), "VALID",
                                 dimension_numbers=("NCHW", "OIHW", "NCHW"))
    y = jnp.maximum(y + p["conv2_b"][None, :, None, None], 0.0)
    y = lax.reduce_window(y, -jnp.inf, lax.max, (1, 1, 2, 2), (1, 1, 2, 2), "VALID")
    y = y.reshape(x.shape[0], -1)
    y = jnp.maximum(y @ p["fc1_w"].T + p["fc1_b"], 0.0)
    y = jnp.maximum(y @ p["fc2_w"].T + p["fc2_b"], 0.0)
    return y @ p["fc3_w"].T + p["fc3_b"]


if __name__ == "__main__":
    key = jax.random.PRNGKey(0)
    kx, kp = jax.random.split(key)
    # 16*6*6 flattened features in the reference module imply a 1x32x32 input.
    x = jax.random.normal(kx, (2, 1, 32, 32), jnp.float32)
    raw = init_params(kp)
    q = prepare_params(raw)

    out = jax.block_until_ready(jax.jit(net_forward)(x, q))
    assert out.shape == (2, 10), out.shape

    ref = jax.block_until_ready(jax.jit(net_reference)(x, raw))
    err = float(jnp.max(jnp.abs(out - ref)))
    assert err < 1e-3, f"max abs err vs reference: {err}"
    print("KERNEL_OK")
</pallas_src>

<mosaic_0001>
module attributes {stable_mosaic.version = 11 : i64} {
  func.func @_net_kernel(%arg0: i32, %arg1: memref<1x32x32xf32, #tpu.memory_space<vmem>>, %arg2: memref<3x32x240xf32, #tpu.memory_space<vmem>>, %arg3: memref<1x240xf32, #tpu.memory_space<vmem>>, %arg4: memref<15x30xf32, #tpu.memory_space<vmem>>, %arg5: memref<15x30xf32, #tpu.memory_space<vmem>>, %arg6: memref<240x120xf32, #tpu.memory_space<vmem>>, %arg7: memref<240x120xf32, #tpu.memory_space<vmem>>, %arg8: memref<3x120x208xf32, #tpu.memory_space<vmem>>, %arg9: memref<1x208xf32, #tpu.memory_space<vmem>>, %arg10: memref<6x13xf32, #tpu.memory_space<vmem>>, %arg11: memref<6x13xf32, #tpu.memory_space<vmem>>, %arg12: memref<208x96xf32, #tpu.memory_space<vmem>>, %arg13: memref<208x96xf32, #tpu.memory_space<vmem>>, %arg14: memref<6x96x128xf32, #tpu.memory_space<vmem>>, %arg15: memref<1x128xf32, #tpu.memory_space<vmem>>, %arg16: memref<128x128xf32, #tpu.memory_space<vmem>>, %arg17: memref<1x128xf32, #tpu.memory_space<vmem>>, %arg18: memref<128x10xf32, #tpu.memory_space<vmem>>, %arg19: memref<1x10xf32, #tpu.memory_space<vmem>>, %arg20: memref<1x1x10xf32, #tpu.memory_space<vmem>>) attributes {dimension_semantics = [#tpu.dimension_semantics<parallel>], iteration_bounds = array<i64: 2>, scalar_prefetch = 0 : i64, scratch_operands = 0 : i64, tpu.core_type = #tpu.core_type<tc>, window_params = [{transform_indices = @transform_0, window_bounds = array<i64: 1, 32, 32>}, {pipeline_mode = #tpu.pipeline_mode<synchronous>, transform_indices = @transform_1, window_bounds = array<i64: 3, 32, 240>}, {pipeline_mode = #tpu.pipeline_mode<synchronous>, transform_indices = @transform_2, window_bounds = array<i64: 1, 240>}, {pipeline_mode = #tpu.pipeline_mode<synchronous>, transform_indices = @transform_3, window_bounds = array<i64: 15, 30>}, {pipeline_mode = #tpu.pipeline_mode<synchronous>, transform_indices = @transform_4, window_bounds = array<i64: 15, 30>}, {pipeline_mode = #tpu.pipeline_mode<synchronous>, transform_indices = @transform_5, window_bounds = array<i64: 240, 120>}, {pipeline_mode = #tpu.pipeline_mode<synchronous>, transform_indices = @transform_6, window_bounds = array<i64: 240, 120>}, {pipeline_mode = #tpu.pipeline_mode<synchronous>, transform_indices = @transform_7, window_bounds = array<i64: 3, 120, 208>}, {pipeline_mode = #tpu.pipeline_mode<synchronous>, transform_indices = @transform_8, window_bounds = array<i64: 1, 208>}, {pipeline_mode = #tpu.pipeline_mode<synchronous>, transform_indices = @transform_9, window_bounds = array<i64: 6, 13>}, {pipeline_mode = #tpu.pipeline_mode<synchronous>, transform_indices = @transform_10, window_bounds = array<i64: 6, 13>}, {pipeline_mode = #tpu.pipeline_mode<synchronous>, transform_indices = @transform_11, window_bounds = array<i64: 208, 96>}, {pipeline_mode = #tpu.pipeline_mode<synchronous>, transform_indices = @transform_12, window_bounds = array<i64: 208, 96>}, {pipeline_mode = #tpu.pipeline_mode<synchronous>, transform_indices = @transform_13, window_bounds = array<i64: 6, 96, 128>}, {pipeline_mode = #tpu.pipeline_mode<synchronous>, transform_indices = @transform_14, window_bounds = array<i64: 1, 128>}, {pipeline_mode = #tpu.pipeline_mode<synchronous>, transform_indices = @transform_15, window_bounds = array<i64: 128, 128>}, {pipeline_mode = #tpu.pipeline_mode<synchronous>, transform_indices = @transform_16, window_bounds = array<i64: 1, 128>}, {pipeline_mode = #tpu.pipeline_mode<synchronous>, transform_indices = @transform_17, window_bounds = array<i64: 128, 10>}, {pipeline_mode = #tpu.pipeline_mode<synchronous>, transform_indices = @transform_18, window_bounds = array<i64: 1, 10>}, {transform_indices = @transform_19, window_bounds = array<i64: 1, 1, 10>}]} {
    %c0 = arith.constant 0 : index
    %c0_0 = arith.constant 0 : index
    %c0_1 = arith.constant 0 : index
    %0 = vector.load %arg1[%c0, %c0_0, %c0_1] : memref<1x32x32xf32, #tpu.memory_space<vmem>>, vector<1x32x32xf32>
    %1 = vector.shape_cast %0 : vector<1x32x32xf32> to vector<32x32xf32>
    %cst = arith.constant 0.000000e+00 : f32
    %2 = vector.broadcast %cst : f32 to vector<30x240xf32>
    %3 = vector.extract_strided_slice %1 {offsets = [0, 0], sizes = [30, 32], strides = [1, 1]} : vector<32x32xf32> to vector<30x32xf32>
    %c0_2 = arith.constant 0 : index
    %c0_3 = arith.constant 0 : index
    %c0_4 = arith.constant 0 : index
    %4 = vector.load %arg2[%c0_2, %c0_3, %c0_4] : memref<3x32x240xf32, #tpu.memory_space<vmem>>, vector<1x32x240xf32>
    %5 = vector.shape_cast %4 : vector<1x32x240xf32> to vector<32x240xf32>
    %cst_5 = arith.constant dense<0.000000e+00> : vector<30x240xf32>
    %6 = tpu.matmul %3, %5, %cst_5 {dimension_numbers = #tpu.dot_dimension_numbers<[1], [0], [0], [1], [0, 0, 1, 1], [], []>} : vector<30x32xf32>, vector<32x240xf32>, vector<30x240xf32> -> vector<30x240xf32>
    %7 = arith.addf %2, %6 : vector<30x240xf32>
    %8 = vector.extract_strided_slice %1 {offsets = [1, 0], sizes = [30, 32], strides = [1, 1]} : vector<32x32xf32> to vector<30x32xf32>
    %c1 = arith.constant 1 : index
    %c0_6 = arith.constant 0 : index
    %c0_7 = arith.constant 0 : index
    %9 = vector.load %arg2[%c1, %c0_6, %c0_7] : memref<3x32x240xf32, #tpu.memory_space<vmem>>, vector<1x32x240xf32>
    %10 = vector.shape_cast %9 : vector<1x32x240xf32> to vector<32x240xf32>
    %cst_8 = arith.constant dense<0.000000e+00> : vector<30x240xf32>
    %11 = tpu.matmul %8, %10, %cst_8 {dimension_numbers = #tpu.dot_dimension_numbers<[1], [0], [0], [1], [0, 0, 1, 1], [], []>} : vector<30x32xf32>, vector<32x240xf32>, vector<30x240xf32> -> vector<30x240xf32>
    %12 = arith.addf %7, %11 : vector<30x240xf32>
    %13 = vector.extract_strided_slice %1 {offsets = [2, 0], sizes = [30, 32], strides = [1, 1]} : vector<32x32xf32> to vector<30x32xf32>
    %c2 = arith.constant 2 : index
    %c0_9 = arith.constant 0 : index
    %c0_10 = arith.constant 0 : index
    %14 = vector.load %arg2[%c2, %c0_9, %c0_10] : memref<3x32x240xf32, #tpu.memory_space<vmem>>, vector<1x32x240xf32>
    %15 = vector.shape_cast %14 : vector<1x32x240xf32> to vector<32x240xf32>
    %cst_11 = arith.constant dense<0.000000e+00> : vector<30x240xf32>
    %16 = tpu.matmul %13, %15, %cst_11 {dimension_numbers = #tpu.dot_dimension_numbers<[1], [0], [0], [1], [0, 0, 1, 1], [], []>} : vector<30x32xf32>, vector<32x240xf32>, vector<30x240xf32> -> vector<30x240xf32>
    %17 = arith.addf %12, %16 : vector<30x240xf32>
    %c0_12 = arith.constant 0 : index
    %c0_13 = arith.constant 0 : index
    %18 = vector.load %arg3[%c0_12, %c0_13] : memref<1x240xf32, #tpu.memory_space<vmem>>, vector<1x240xf32>
    %19 = vector.broadcast %18 : vector<1x240xf32> to vector<30x240xf32>
    %20 = arith.addf %17, %19 : vector<30x240xf32>
    %cst_14 = arith.constant 0.000000e+00 : f32
    %21 = vector.broadcast %cst_14 : f32 to vector<30x240xf32>
    %22 = arith.maximumf %20, %21 : vector<30x240xf32>
    %c0_15 = arith.constant 0 : index
    %c0_16 = arith.constant 0 : index
    %23 = vector.load %arg4[%c0_15, %c0_16] : memref<15x30xf32, #tpu.memory_space<vmem>>, vector<15x30xf32>
    %cst_17 = arith.constant dense<0.000000e+00> : vector<15x240xf32>
    %24 = tpu.matmul %23, %22, %cst_17 {dimension_numbers = #tpu.dot_dimension_numbers<[1], [0], [0], [1], [0, 0, 1, 1], [], []>} : vector<15x30xf32>, vector<30x240xf32>, vector<15x240xf32> -> vector<15x240xf32>
    %c0_18 = arith.constant 0 : index
    %c0_19 = arith.constant 0 : index
    %25 = vector.load %arg5[%c0_18, %c0_19] : memref<15x30xf32, #tpu.memory_space<vmem>>, vector<15x30xf32>
    %cst_20 = arith.constant dense<0.000000e+00> : vector<15x240xf32>
    %26 = tpu.matmul %25, %22, %cst_20 {dimension_numbers = #tpu.dot_dimension_numbers<[1], [0], [0], [1], [0, 0, 1, 1], [], []>} : vector<15x30xf32>, vector<30x240xf32>, vector<15x240xf32> -> vector<15x240xf32>
    %27 = arith.maximumf %24, %26 : vector<15x240xf32>
    %c0_21 = arith.constant 0 : index
    %c0_22 = arith.constant 0 : index
    %28 = vector.load %arg6[%c0_21, %c0_22] : memref<240x120xf32, #tpu.memory_space<vmem>>, vector<240x120xf32>
    %cst_23 = arith.constant dense<0.000000e+00> : vector<15x120xf32>
    %29 = tpu.matmul %27, %28, %cst_23 {dimension_numbers = #tpu.dot_dimension_numbers<[1], [0], [0], [1], [0, 0, 1, 1], [], []>} : vector<15x240xf32>, vector<240x120xf32>, vector<15x120xf32> -> vector<15x120xf32>
    %c0_24 = arith.constant 0 : index
    %c0_25 = arith.constant 0 : index
    %30 = vector.load %arg7[%c0_24, %c0_25] : memref<240x120xf32, #tpu.memory_space<vmem>>, vector<240x120xf32>
    %cst_26 = arith.constant dense<0.000000e+00> : vector<15x120xf32>
    %31 = tpu.matmul %27, %30, %cst_26 {dimension_numbers = #tpu.dot_dimension_numbers<[1], [0], [0], [1], [0, 0, 1, 1], [], []>} : vector<15x240xf32>, vector<240x120xf32>, vector<15x120xf32> -> vector<15x120xf32>
    %32 = arith.maximumf %29, %31 : vector<15x120xf32>
    %cst_27 = arith.constant 0.000000e+00 : f32
    %33 = vector.broadcast %cst_27 : f32 to vector<13x208xf32>
    %34 = vector.extract_strided_slice %32 {offsets = [0, 0], sizes = [13, 120], strides = [1, 1]} : vector<15x120xf32> to vector<13x120xf32>
    %c0_28 = arith.constant 0 : index
    %c0_29 = arith.constant 0 : index
    %c0_30 = arith.constant 0 : index
    %35 = vector.load %arg8[%c0_28, %c0_29, %c0_30] : memref<3x120x208xf32, #tpu.memory_space<vmem>>, vector<1x120x208xf32>
    %36 = vector.shape_cast %35 : vector<1x120x208xf32> to vector<120x208xf32>
    %cst_31 = arith.constant dense<0.000000e+00> : vector<13x208xf32>
    %37 = tpu.matmul %34, %36, %cst_31 {dimension_numbers = #tpu.dot_dimension_numbers<[1], [0], [0], [1], [0, 0, 1, 1], [], []>} : vector<13x120xf32>, vector<120x208xf32>, vector<13x208xf32> -> vector<13x208xf32>
    %38 = arith.addf %33, %37 : vector<13x208xf32>
    %39 = vector.extract_strided_slice %32 {offsets = [1, 0], sizes = [13, 120], strides = [1, 1]} : vector<15x120xf32> to vector<13x120xf32>
    %c1_32 = arith.constant 1 : index
    %c0_33 = arith.constant 0 : index
    %c0_34 = arith.constant 0 : index
    %40 = vector.load %arg8[%c1_32, %c0_33, %c0_34] : memref<3x120x208xf32, #tpu.memory_space<vmem>>, vector<1x120x208xf32>
    %41 = vector.shape_cast %40 : vector<1x120x208xf32> to vector<120x208xf32>
    %cst_35 = arith.constant dense<0.000000e+00> : vector<13x208xf32>
    %42 = tpu.matmul %39, %41, %cst_35 {dimension_numbers = #tpu.dot_dimension_numbers<[1], [0], [0], [1], [0, 0, 1, 1], [], []>} : vector<13x120xf32>, vector<120x208xf32>, vector<13x208xf32> -> vector<13x208xf32>
    %43 = arith.addf %38, %42 : vector<13x208xf32>
    %44 = vector.extract_strided_slice %32 {offsets = [2, 0], sizes = [13, 120], strides = [1, 1]} : vector<15x120xf32> to vector<13x120xf32>
    %c2_36 = arith.constant 2 : index
    %c0_37 = arith.constant 0 : index
    %c0_38 = arith.constant 0 : index
    %45 = vector.load %arg8[%c2_36, %c0_37, %c0_38] : memref<3x120x208xf32, #tpu.memory_space<vmem>>, vector<1x120x208xf32>
    %46 = vector.shape_cast %45 : vector<1x120x208xf32> to vector<120x208xf32>
    %cst_39 = arith.constant dense<0.000000e+00> : vector<13x208xf32>
    %47 = tpu.matmul %44, %46, %cst_39 {dimension_numbers = #tpu.dot_dimension_numbers<[1], [0], [0], [1], [0, 0, 1, 1], [], []>} : vector<13x120xf32>, vector<120x208xf32>, vector<13x208xf32> -> vector<13x208xf32>
    %48 = arith.addf %43, %47 : vector<13x208xf32>
    %c0_40 = arith.constant 0 : index
    %c0_41 = arith.constant 0 : index
    %49 = vector.load %arg9[%c0_40, %c0_41] : memref<1x208xf32, #tpu.memory_space<vmem>>, vector<1x208xf32>
    %50 = vector.broadcast %49 : vector<1x208xf32> to vector<13x208xf32>
    %51 = arith.addf %48, %50 : vector<13x208xf32>
    %cst_42 = arith.constant 0.000000e+00 : f32
    %52 = vector.broadcast %cst_42 : f32 to vector<13x208xf32>
    %53 = arith.maximumf %51, %52 : vector<13x208xf32>
    %c0_43 = arith.constant 0 : index
    %c0_44 = arith.constant 0 : index
    %54 = vector.load %arg10[%c0_43, %c0_44] : memref<6x13xf32, #tpu.memory_space<vmem>>, vector<6x13xf32>
    %cst_45 = arith.constant dense<0.000000e+00> : vector<6x208xf32>
    %55 = tpu.matmul %54, %53, %cst_45 {dimension_numbers = #tpu.dot_dimension_numbers<[1], [0], [0], [1], [0, 0, 1, 1], [], []>} : vector<6x13xf32>, vector<13x208xf32>, vector<6x208xf32> -> vector<6x208xf32>
    %c0_46 = arith.constant 0 : index
    %c0_47 = arith.constant 0 : index
    %56 = vector.load %arg11[%c0_46, %c0_47] : memref<6x13xf32, #tpu.memory_space<vmem>>, vector<6x13xf32>
    %cst_48 = arith.constant dense<0.000000e+00> : vector<6x208xf32>
    %57 = tpu.matmul %56, %53, %cst_48 {dimension_numbers = #tpu.dot_dimension_numbers<[1], [0], [0], [1], [0, 0, 1, 1], [], []>} : vector<6x13xf32>, vector<13x208xf32>, vector<6x208xf32> -> vector<6x208xf32>
    %58 = arith.maximumf %55, %57 : vector<6x208xf32>
    %c0_49 = arith.constant 0 : index
    %c0_50 = arith.constant 0 : index
    %59 = vector.load %arg12[%c0_49, %c0_50] : memref<208x96xf32, #tpu.memory_space<vmem>>, vector<208x96xf32>
    %cst_51 = arith.constant dense<0.000000e+00> : vector<6x96xf32>
    %60 = tpu.matmul %58, %59, %cst_51 {dimension_numbers = #tpu.dot_dimension_numbers<[1], [0], [0], [1], [0, 0, 1, 1], [], []>} : vector<6x208xf32>, vector<208x96xf32>, vector<6x96xf32> -> vector<6x96xf32>
    %c0_52 = arith.constant 0 : index
    %c0_53 = arith.constant 0 : index
    %61 = vector.load %arg13[%c0_52, %c0_53] : memref<208x96xf32, #tpu.memory_space<vmem>>, vector<208x96xf32>
    %cst_54 = arith.constant dense<0.000000e+00> : vector<6x96xf32>
    %62 = tpu.matmul %58, %61, %cst_54 {dimension_numbers = #tpu.dot_dimension_numbers<[1], [0], [0], [1], [0, 0, 1, 1], [], []>} : vector<6x208xf32>, vector<208x96xf32>, vector<6x96xf32> -> vector<6x96xf32>
    %63 = arith.maximumf %60, %62 : vector<6x96xf32>
    %c0_55 = arith.constant 0 : index
    %c0_56 = arith.constant 0 : index
    %64 = vector.load %arg15[%c0_55, %c0_56] : memref<1x128xf32, #tpu.memory_space<vmem>>, vector<1x128xf32>
    %65 = vector.extract_strided_slice %63 {offsets = [0, 0], sizes = [1, 96], strides = [1, 1]} : vector<6x96xf32> to vector<1x96xf32>
    %c0_57 = arith.constant 0 : index
    %c0_58 = arith.constant 0 : index
    %c0_59 = arith.constant 0 : index
    %66 = vector.load %arg14[%c0_57, %c0_58, %c0_59] : memref<6x96x128xf32, #tpu.memory_space<vmem>>, vector<1x96x128xf32>
    %67 = vector.shape_cast %66 : vector<1x96x128xf32> to vector<96x128xf32>
    %cst_60 = arith.constant dense<0.000000e+00> : vector<1x128xf32>
    %68 = tpu.matmul %65, %67, %cst_60 {dimension_numbers = #tpu.dot_dimension_numbers<[1], [0], [0], [1], [0, 0, 1, 1], [], []>} : vector<1x96xf32>, vector<96x128xf32>, vector<1x128xf32> -> vector<1x128xf32>
    %69 = arith.addf %64, %68 : vector<1x128xf32>
    %70 = vector.extract_strided_slice %63 {offsets = [1, 0], sizes = [1, 96], strides = [1, 1]} : vector<6x96xf32> to vector<1x96xf32>
    %c1_61 = arith.constant 1 : index
    %c0_62 = arith.constant 0 : index
    %c0_63 = arith.constant 0 : index
    %71 = vector.load %arg14[%c1_61, %c0_62, %c0_63] : memref<6x96x128xf32, #tpu.memory_space<vmem>>, vector<1x96x128xf32>
    %72 = vector.shape_cast %71 : vector<1x96x128xf32> to vector<96x128xf32>
    %cst_64 = arith.constant dense<0.000000e+00> : vector<1x128xf32>
    %73 = tpu.matmul %70, %72, %cst_64 {dimension_numbers = #tpu.dot_dimension_numbers<[1], [0], [0], [1], [0, 0, 1, 1], [], []>} : vector<1x96xf32>, vector<96x128xf32>, vector<1x128xf32> -> vector<1x128xf32>
    %74 = arith.addf %69, %73 : vector<1x128xf32>
    %75 = vector.extract_strided_slice %63 {offsets = [2, 0], sizes = [1, 96], strides = [1, 1]} : vector<6x96xf32> to vector<1x96xf32>
    %c2_65 = arith.constant 2 : index
    %c0_66 = arith.constant 0 : index
    %c0_67 = arith.constant 0 : index
    %76 = vector.load %arg14[%c2_65, %c0_66, %c0_67] : memref<6x96x128xf32, #tpu.memory_space<vmem>>, vector<1x96x128xf32>
    %77 = vector.shape_cast %76 : vector<1x96x128xf32> to vector<96x128xf32>
    %cst_68 = arith.constant dense<0.000000e+00> : vector<1x128xf32>
    %78 = tpu.matmul %75, %77, %cst_68 {dimension_numbers = #tpu.dot_dimension_numbers<[1], [0], [0], [1], [0, 0, 1, 1], [], []>} : vector<1x96xf32>, vector<96x128xf32>, vector<1x128xf32> -> vector<1x128xf32>
    %79 = arith.addf %74, %78 : vector<1x128xf32>
    %80 = vector.extract_strided_slice %63 {offsets = [3, 0], sizes = [1, 96], strides = [1, 1]} : vector<6x96xf32> to vector<1x96xf32>
    %c3 = arith.constant 3 : index
    %c0_69 = arith.constant 0 : index
    %c0_70 = arith.constant 0 : index
    %81 = vector.load %arg14[%c3, %c0_69, %c0_70] : memref<6x96x128xf32, #tpu.memory_space<vmem>>, vector<1x96x128xf32>
    %82 = vector.shape_cast %81 : vector<1x96x128xf32> to vector<96x128xf32>
    %cst_71 = arith.constant dense<0.000000e+00> : vector<1x128xf32>
    %83 = tpu.matmul %80, %82, %cst_71 {dimension_numbers = #tpu.dot_dimension_numbers<[1], [0], [0], [1], [0, 0, 1, 1], [], []>} : vector<1x96xf32>, vector<96x128xf32>, vector<1x128xf32> -> vector<1x128xf32>
    %84 = arith.addf %79, %83 : vector<1x128xf32>
    %85 = vector.extract_strided_slice %63 {offsets = [4, 0], sizes = [1, 96], strides = [1, 1]} : vector<6x96xf32> to vector<1x96xf32>
    %c4 = arith.constant 4 : index
    %c0_72 = arith.constant 0 : index
    %c0_73 = arith.constant 0 : index
    %86 = vector.load %arg14[%c4, %c0_72, %c0_73] : memref<6x96x128xf32, #tpu.memory_space<vmem>>, vector<1x96x128xf32>
    %87 = vector.shape_cast %86 : vector<1x96x128xf32> to vector<96x128xf32>
    %cst_74 = arith.constant dense<0.000000e+00> : vector<1x128xf32>
    %88 = tpu.matmul %85, %87, %cst_74 {dimension_numbers = #tpu.dot_dimension_numbers<[1], [0], [0], [1], [0, 0, 1, 1], [], []>} : vector<1x96xf32>, vector<96x128xf32>, vector<1x128xf32> -> vector<1x128xf32>
    %89 = arith.addf %84, %88 : vector<1x128xf32>
    %90 = vector.extract_strided_slice %63 {offsets = [5, 0], sizes = [1, 96], strides = [1, 1]} : vector<6x96xf32> to vector<1x96xf32>
    %c5 = arith.constant 5 : index
    %c0_75 = arith.constant 0 : index
    %c0_76 = arith.constant 0 : index
    %91 = vector.load %arg14[%c5, %c0_75, %c0_76] : memref<6x96x128xf32, #tpu.memory_space<vmem>>, vector<1x96x128xf32>
    %92 = vector.shape_cast %91 : vector<1x96x128xf32> to vector<96x128xf32>
    %cst_77 = arith.constant dense<0.000000e+00> : vector<1x128xf32>
    %93 = tpu.matmul %90, %92, %cst_77 {dimension_numbers = #tpu.dot_dimension_numbers<[1], [0], [0], [1], [0, 0, 1, 1], [], []>} : vector<1x96xf32>, vector<96x128xf32>, vector<1x128xf32> -> vector<1x128xf32>
    %94 = arith.addf %89, %93 : vector<1x128xf32>
    %cst_78 = arith.constant 0.000000e+00 : f32
    %95 = vector.broadcast %cst_78 : f32 to vector<1x128xf32>
    %96 = arith.maximumf %94, %95 : vector<1x128xf32>
    %c0_79 = arith.constant 0 : index
    %c0_80 = arith.constant 0 : index
    %97 = vector.load %arg16[%c0_79, %c0_80] : memref<128x128xf32, #tpu.memory_space<vmem>>, vector<128x128xf32>
    %cst_81 = arith.constant dense<0.000000e+00> : vector<1x128xf32>
    %98 = tpu.matmul %96, %97, %cst_81 {dimension_numbers = #tpu.dot_dimension_numbers<[1], [0], [0], [1], [0, 0, 1, 1], [], []>} : vector<1x128xf32>, vector<128x128xf32>, vector<1x128xf32> -> vector<1x128xf32>
    %c0_82 = arith.constant 0 : index
    %c0_83 = arith.constant 0 : index
    %99 = vector.load %arg17[%c0_82, %c0_83] : memref<1x128xf32, #tpu.memory_space<vmem>>, vector<1x128xf32>
    %100 = arith.addf %98, %99 : vector<1x128xf32>
    %cst_84 = arith.constant 0.000000e+00 : f32
    %101 = vector.broadcast %cst_84 : f32 to vector<1x128xf32>
    %102 = arith.maximumf %100, %101 : vector<1x128xf32>
    %c0_85 = arith.constant 0 : index
    %c0_86 = arith.constant 0 : index
    %103 = vector.load %arg18[%c0_85, %c0_86] : memref<128x10xf32, #tpu.memory_space<vmem>>, vector<128x10xf32>
    %cst_87 = arith.constant dense<0.000000e+00> : vector<1x10xf32>
    %104 = tpu.matmul %102, %103, %cst_87 {dimension_numbers = #tpu.dot_dimension_numbers<[1], [0], [0], [1], [0, 0, 1, 1], [], []>} : vector<1x128xf32>, vector<128x10xf32>, vector<1x10xf32> -> vector<1x10xf32>
    %c0_88 = arith.constant 0 : index
    %c0_89 = arith.constant 0 : index
    %105 = vector.load %arg19[%c0_88, %c0_89] : memref<1x10xf32, #tpu.memory_space<vmem>>, vector<1x10xf32>
    %106 = arith.addf %104, %105 : vector<1x10xf32>
    %c0_90 = arith.constant 0 : index
    %c0_91 = arith.constant 0 : index
    %c0_92 = arith.constant 0 : index
    %107 = vector.load %arg20[%c0_90, %c0_91, %c0_92] : memref<1x1x10xf32, #tpu.memory_space<vmem>>, vector<1x1x10xf32>
    %108 = vector.shape_cast %107 : vector<1x1x10xf32> to vector<1x10xf32>
    %109 = vector.shape_cast %106 : vector<1x10xf32> to vector<1x1x10xf32>
    tpu.vector_store %arg20[%c0_90, %c0_91, %c0_92], %109 {strides = array<i32>} : memref<1x1x10xf32, #tpu.memory_space<vmem>>, vector<1x1x10xf32>,
    return
  }
  func.func @transform_0(%arg0: i32) -> (i32, i32, i32) {
    %c0_i32 = arith.constant 0 : i32
    %c0_i32_0 = arith.constant 0 : i32
    %c0_i32_1 = arith.constant 0 : i32
    return %arg0, %c0_i32, %c0_i32_0 : i32, i32, i32
  }
  func.func @transform_1(%arg0: i32) -> (i32, i32, i32) {
    %c0_i32 = arith.constant 0 : i32
    %c0_i32_0 = arith.constant 0 : i32
    %c0_i32_1 = arith.constant 0 : i32
    %c0_i32_2 = arith.constant 0 : i32
    return %c0_i32, %c0_i32_0, %c0_i32_1 : i32, i32, i32
  }
  func.func @transform_2(%arg0: i32) -> (i32, i32) {
    %c0_i32 = arith.constant 0 : i32
    %c0_i32_0 = arith.constant 0 : i32
    %c0_i32_1 = arith.constant 0 : i32
    return %c0_i32, %c0_i32_0 : i32, i32
  }
  func.func @transform_3(%arg0: i32) -> (i32, i32) {
    %c0_i32 = arith.constant 0 : i32
    %c0_i32_0 = arith.constant 0 : i32
    %c0_i32_1 = arith.constant 0 : i32
    return %c0_i32, %c0_i32_0 : i32, i32
  }
  func.func @transform_4(%arg0: i32) -> (i32, i32) {
    %c0_i32 = arith.constant 0 : i32
    %c0_i32_0 = arith.constant 0 : i32
    %c0_i32_1 = arith.constant 0 : i32
    return %c0_i32, %c0_i32_0 : i32, i32
  }
  func.func @transform_5(%arg0: i32) -> (i32, i32) {
    %c0_i32 = arith.constant 0 : i32
    %c0_i32_0 = arith.constant 0 : i32
    %c0_i32_1 = arith.constant 0 : i32
    return %c0_i32, %c0_i32_0 : i32, i32
  }
  func.func @transform_6(%arg0: i32) -> (i32, i32) {
    %c0_i32 = arith.constant 0 : i32
    %c0_i32_0 = arith.constant 0 : i32
    %c0_i32_1 = arith.constant 0 : i32
    return %c0_i32, %c0_i32_0 : i32, i32
  }
  func.func @transform_7(%arg0: i32) -> (i32, i32, i32) {
    %c0_i32 = arith.constant 0 : i32
    %c0_i32_0 = arith.constant 0 : i32
    %c0_i32_1 = arith.constant 0 : i32
    %c0_i32_2 = arith.constant 0 : i32
    return %c0_i32, %c0_i32_0, %c0_i32_1 : i32, i32, i32
  }
  func.func @transform_8(%arg0: i32) -> (i32, i32) {
    %c0_i32 = arith.constant 0 : i32
    %c0_i32_0 = arith.constant 0 : i32
    %c0_i32_1 = arith.constant 0 : i32
    return %c0_i32, %c0_i32_0 : i32, i32
  }
  func.func @transform_9(%arg0: i32) -> (i32, i32) {
    %c0_i32 = arith.constant 0 : i32
    %c0_i32_0 = arith.constant 0 : i32
    %c0_i32_1 = arith.constant 0 : i32
    return %c0_i32, %c0_i32_0 : i32, i32
  }
  func.func @transform_10(%arg0: i32) -> (i32, i32) {
    %c0_i32 = arith.constant 0 : i32
    %c0_i32_0 = arith.constant 0 : i32
    %c0_i32_1 = arith.constant 0 : i32
    return %c0_i32, %c0_i32_0 : i32, i32
  }
  func.func @transform_11(%arg0: i32) -> (i32, i32) {
    %c0_i32 = arith.constant 0 : i32
    %c0_i32_0 = arith.constant 0 : i32
    %c0_i32_1 = arith.constant 0 : i32
    return %c0_i32, %c0_i32_0 : i32, i32
  }
  func.func @transform_12(%arg0: i32) -> (i32, i32) {
    %c0_i32 = arith.constant 0 : i32
    %c0_i32_0 = arith.constant 0 : i32
    %c0_i32_1 = arith.constant 0 : i32
    return %c0_i32, %c0_i32_0 : i32, i32
  }
  func.func @transform_13(%arg0: i32) -> (i32, i32, i32) {
    %c0_i32 = arith.constant 0 : i32
    %c0_i32_0 = arith.constant 0 : i32
    %c0_i32_1 = arith.constant 0 : i32
    %c0_i32_2 = arith.constant 0 : i32
    return %c0_i32, %c0_i32_0, %c0_i32_1 : i32, i32, i32
  }
  func.func @transform_14(%arg0: i32) -> (i32, i32) {
    %c0_i32 = arith.constant 0 : i32
    %c0_i32_0 = arith.constant 0 : i32
    %c0_i32_1 = arith.constant 0 : i32
    return %c0_i32, %c0_i32_0 : i32, i32
  }
  func.func @transform_15(%arg0: i32) -> (i32, i32) {
    %c0_i32 = arith.constant 0 : i32
    %c0_i32_0 = arith.constant 0 : i32
    %c0_i32_1 = arith.constant 0 : i32
    return %c0_i32, %c0_i32_0 : i32, i32
  }
  func.func @transform_16(%arg0: i32) -> (i32, i32) {
    %c0_i32 = arith.constant 0 : i32
    %c0_i32_0 = arith.constant 0 : i32
    %c0_i32_1 = arith.constant 0 : i32
    return %c0_i32, %c0_i32_0 : i32, i32
  }
  func.func @transform_17(%arg0: i32) -> (i32, i32) {
    %c0_i32 = arith.constant 0 : i32
    %c0_i32_0 = arith.constant 0 : i32
    %c0_i32_1 = arith.constant 0 : i32
    return %c0_i32, %c0_i32_0 : i32, i32
  }
  func.func @transform_18(%arg0: i32) -> (i32, i32) {
    %c0_i32 = arith.constant 0 : i32
    %c0_i32_0 = arith.constant 0 : i32
    %c0_i32_1 = arith.constant 0 : i32
    return %c0_i32, %c0_i32_0 : i32, i32
  }
  func.func @transform_19(%arg0: i32) -> (i32, i32, i32) {
    %c0_i32 = arith.constant 0 : i32
    %c0_i32_0 = arith.constant 0 : i32
    %c0_i32_1 = arith.constant 0 : i32
    return %arg0, %c0_i32, %c0_i32_0 : i32, i32, i32
  }
}

</mosaic_0001>

<llo_original>
// kernel: net_forward.1
$region0: #{net_forward.1}
  #allocation0 [shape = 'u32[]', space=smem, size = 0x4, offset = 0x4, fixed_abs, tag = 'smem constant byte address 0x4 - core index']
  #allocation1 [shape = 'u32[72,128]{1,0:T(1,128)}', space=vmem, size = 0x9000, scoped, tag = 'internal scratch']
  %s0 = inlined_call_operand.vmem [shape: f32[2,32,32], index: 0, kind: input, shape index: {}]
  %s1 = inlined_call_operand.vmem [shape: f32[3,32,240], index: 1, kind: input, shape index: {}]
  %s2 = inlined_call_operand.vmem [shape: f32[1,240], index: 2, kind: input, shape index: {}]
  %s3 = inlined_call_operand.vmem [shape: f32[15,30], index: 3, kind: input, shape index: {}]
  %s4 = inlined_call_operand.vmem [shape: f32[15,30], index: 4, kind: input, shape index: {}]
  %s5 = inlined_call_operand.vmem [shape: f32[240,120], index: 5, kind: input, shape index: {}]
  %s6 = inlined_call_operand.vmem [shape: f32[240,120], index: 6, kind: input, shape index: {}]
  %s7 = inlined_call_operand.vmem [shape: f32[3,120,208], index: 7, kind: input, shape index: {}]
  %s8 = inlined_call_operand.vmem [shape: f32[1,208], index: 8, kind: input, shape index: {}]
  %s9 = inlined_call_operand.vmem [shape: f32[6,13], index: 9, kind: input, shape index: {}]
  %s10 = inlined_call_operand.vmem [shape: f32[6,13], index: 10, kind: input, shape index: {}]
  %s11 = inlined_call_operand.vmem [shape: f32[208,96], index: 11, kind: input, shape index: {}]
  %s12 = inlined_call_operand.vmem [shape: f32[208,96], index: 12, kind: input, shape index: {}]
  %s13 = inlined_call_operand.vmem [shape: f32[6,96,128], index: 13, kind: input, shape index: {}]
  %s14 = inlined_call_operand.vmem [shape: f32[1,128], index: 14, kind: input, shape index: {}]
  %s15 = inlined_call_operand.vmem [shape: f32[128,128], index: 15, kind: input, shape index: {}]
  %s16 = inlined_call_operand.vmem [shape: f32[1,128], index: 16, kind: input, shape index: {}]
  %s17 = inlined_call_operand.vmem [shape: f32[128,10], index: 17, kind: input, shape index: {}]
  %s18 = inlined_call_operand.vmem [shape: f32[1,10], index: 18, kind: input, shape index: {}]
  %s19 = inlined_call_operand.hbm [shape: f32[2,1,10], index: 19, kind: output, shape index: {}]
  %s20 = sld [smem:[#allocation0]]
  $region109: #{net_forward.1} parent=0
    _
  %s22 = ssub.s32 1, %s20
  %s23 = scalar_select 0, %s22, %s20
  $region1: #{net_forward.1} parent=0
    #allocation2 [shape = 'u8[1024]{0}', space=vmem, size = 0x400, scoped, tag = 'output window, operand 0']
    #allocation3 [shape = 's32[2]{0}', space=sflag, size = 0x8, scoped, tag = 'scoped memory for net_forward.1']
    %24 = vsyncpa [#allocation3], 0
    %s25 = scalar_lea.sflag [#allocation3], 1
    %26 = vsyncpa %s25, 0
    loop: start=0, step=1, limit=4
    $region2: #{net_forward.1} parent=1 // loop_pre_header
      _
    $region3: #{net_forward.1} parent=1 // loop_header
      %s28 = sphi 0, %s32
      %p29 = scmp.ge.s32.totalorder %s28, 4
      %s38 = sphi 0, %s40
      %s41 = sphi 0, %s38
      %s42 = sphi 0, %s41
      %s58 = sphi 0, %s42
      %s62 = sphi 0, %s62
      %s64 = sphi 0, %s62
      %s65 = sphi 0, %s64
      %s79 = sphi 0, %s65
      %s83 = sphi 0, %s83
      %s85 = sphi 0, %s83
      %s86 = sphi 0, %s85
      %s100 = sphi 0, %s86
      %s104 = sphi 0, %s104
      %s106 = sphi 0, %s104
      %s107 = sphi 0, %s106
      %s121 = sphi 0, %s107
      %s125 = sphi 0, %s125
      %s127 = sphi 0, %s125
      %s128 = sphi 0, %s127
      %s142 = sphi 0, %s128
      %s146 = sphi 0, %s146
      %s148 = sphi 0, %s146
      %s149 = sphi 0, %s148
      %s163 = sphi 0, %s149
      %s167 = sphi 0, %s167
      %s169 = sphi 0, %s167
      %s170 = sphi 0, %s169
      %s184 = sphi 0, %s170
      %s188 = sphi 0, %s188
      %s190 = sphi 0, %s188
      %s191 = sphi 0, %s190
      %s205 = sphi 0, %s191
      %s209 = sphi 0, %s209
      %s211 = sphi 0, %s209
      %s212 = sphi 0, %s211
      %s226 = sphi 0, %s212
      %s230 = sphi 0, %s230
      %s232 = sphi 0, %s230
      %s233 = sphi 0, %s232
      %s247 = sphi 0, %s233
      %s251 = sphi 0, %s251
      %s253 = sphi 0, %s251
      %s254 = sphi 0, %s253
      %s268 = sphi 0, %s254
      %s272 = sphi 0, %s272
      %s274 = sphi 0, %s272
      %s275 = sphi 0, %s274
      %s289 = sphi 0, %s275
      %s293 = sphi 0, %s293
      %s295 = sphi 0, %s293
      %s296 = sphi 0, %s295
      %s310 = sphi 0, %s296
      %s314 = sphi 0, %s314
      %s316 = sphi 0, %s314
      %s317 = sphi 0, %s316
      %s331 = sphi 0, %s317
      %s335 = sphi 0, %s335
      %s337 = sphi 0, %s335
      %s338 = sphi 0, %s337
      %s352 = sphi 0, %s338
      %s356 = sphi 0, %s356
      %s358 = sphi 0, %s356
      %s359 = sphi 0, %s358
      %s373 = sphi 0, %s359
      %s377 = sphi 0, %s377
      %s379 = sphi 0, %s377
      %s380 = sphi 0, %s379
      %s394 = sphi 0, %s380
      %s398 = sphi 0, %s398
      %s400 = sphi 0, %s398
      %s401 = sphi 0, %s400
      %s415 = sphi 0, %s401
      %s419 = sphi 0, %s419
      %s421 = sphi 0, %s419
      %s422 = sphi 0, %s421
      %s436 = sphi 0, %s422
      %s442 = sphi 0, %s444
      %s445 = sphi 0, %s442
      %s446 = sphi 0, %s445
      %s462 = sphi 0, %s446
    $region4: #{net_forward.1} parent=1 // loop_header_branch
      %31 = sbr.rel (%p29) target = $region8
    $region5: #{net_forward.1} parent=1 // loop_body
      %s33 = ssub.s32 %s28, 1
      %s34 = ssub.s32 %s28, 2
      %s35 = sadd.s32 %s28, 1
      %s36 = ssub.s32 %s28, %s35
      %p37 = scmp.eq.s32.totalorder %s36, 0
      %s39 = sadd.s32 %s38, 1
      %s40 = scalar_select %p37, %s38, %s39
      %p43 = pneg %p37
      %p44 = scmp.eq.s32.totalorder %s28, 1
      %p45 = por %p43, %p44
      %p46 = scmp.ne.s32.totalorder %s38, %s41
      %p47 = scmp.eq.s32.totalorder %s28, 0
      %p48 = por %p46, %p47
      %p49 = scmp.ne.s32.totalorder %s38, %s41
      %p50 = scmp.eq.s32.totalorder %s33, 1
      %p51 = por %p49, %p50
      %p52 = scmp.ne.s32.totalorder %s41, %s42
      %p53 = scmp.eq.s32.totalorder %s33, 0
      %p54 = por %p52, %p53
      %p55 = scmp.ne.s32.totalorder %s41, %s42
      %p56 = scmp.eq.s32.totalorder %s34, 1
      %p57 = por %p55, %p56
      %p59 = scmp.ne.s32.totalorder %s42, %s58
      %p60 = scmp.eq.s32.totalorder %s34, 0
      %p61 = por %p59, %p60
      %s63 = sadd.s32 %s62, 1
      %p66 = scmp.eq.s32.totalorder %s28, 1
      %p67 = scmp.ne.s32.totalorder %s62, %s64
      %p68 = scmp.eq.s32.totalorder %s28, 0
      %p69 = por %p67, %p68
      %p70 = scmp.ne.s32.totalorder %s62, %s64
      %p71 = scmp.eq.s32.totalorder %s33, 1
      %p72 = por %p70, %p71
      %p73 = scmp.ne.s32.totalorder %s64, %s65
      %p74 = scmp.eq.s32.totalorder %s33, 0
      %p75 = por %p73, %p74
      %p76 = scmp.ne.s32.totalorder %s64, %s65
      %p77 = scmp.eq.s32.totalorder %s34, 1
      %p78 = por %p76, %p77
      %p80 = scmp.ne.s32.totalorder %s65, %s79
      %p81 = scmp.eq.s32.totalorder %s34, 0
      %p82 = por %p80, %p81
      %s84 = sadd.s32 %s83, 1
      %p87 = scmp.eq.s32.totalorder %s28, 1
      %p88 = scmp.ne.s32.totalorder %s83, %s85
      %p89 = scmp.eq.s32.totalorder %s28, 0
      %p90 = por %p88, %p89
      %p91 = scmp.ne.s32.totalorder %s83, %s85
      %p92 = scmp.eq.s32.totalorder %s33, 1
      %p93 = por %p91, %p92
      %p94 = scmp.ne.s32.totalorder %s85, %s86
      %p95 = scmp.eq.s32.totalorder %s33, 0
      %p96 = por %p94, %p95
      %p97 = scmp.ne.s32.totalorder %s85, %s86
      %p98 = scmp.eq.s32.totalorder %s34, 1
      %p99 = por %p97, %p98
      %p101 = scmp.ne.s32.totalorder %s86, %s100
      %p102 = scmp.eq.s32.totalorder %s34, 0
      %p103 = por %p101, %p102
      %s105 = sadd.s32 %s104, 1
      %p108 = scmp.eq.s32.totalorder %s28, 1
      %p109 = scmp.ne.s32.totalorder %s104, %s106
      %p110 = scmp.eq.s32.totalorder %s28, 0
      %p111 = por %p109, %p110
      %p112 = scmp.ne.s32.totalorder %s104, %s106
      %p113 = scmp.eq.s32.totalorder %s33, 1
      %p114 = por %p112, %p113
      %p115 = scmp.ne.s32.totalorder %s106, %s107
      %p116 = scmp.eq.s32.totalorder %s33, 0
      %p117 = por %p115, %p116
      %p118 = scmp.ne.s32.totalorder %s106, %s107
      %p119 = scmp.eq.s32.totalorder %s34, 1
      %p120 = por %p118, %p119
      %p122 = scmp.ne.s32.totalorder %s107, %s121
      %p123 = scmp.eq.s32.totalorder %s34, 0
      %p124 = por %p122, %p123
      %s126 = sadd.s32 %s125, 1
      %p129 = scmp.eq.s32.totalorder %s28, 1
      %p130 = scmp.ne.s32.totalorder %s125, %s127
      %p131 = scmp.eq.s32.totalorder %s28, 0
      %p132 = por %p130, %p131
      %p133 = scmp.ne.s32.totalorder %s125, %s127
      %p134 = scmp.eq.s32.totalorder %s33, 1
      %p135 = por %p133, %p134
      %p136 = scmp.ne.s32.totalorder %s127, %s128
      %p137 = scmp.eq.s32.totalorder %s33, 0
      %p138 = por %p136, %p137
      %p139 = scmp.ne.s32.totalorder %s127, %s128
      %p140 = scmp.eq.s32.totalorder %s34, 1
      %p141 = por %p139, %p140
      %p143 = scmp.ne.s32.totalorder %s128, %s142
      %p144 = scmp.eq.s32.totalorder %s34, 0
      %p145 = por %p143, %p144
      %s147 = sadd.s32 %s146, 1
      %p150 = scmp.eq.s32.totalorder %s28, 1
      %p151 = scmp.ne.s32.totalorder %s146, %s148
      %p152 = scmp.eq.s32.totalorder %s28, 0
      %p153 = por %p151, %p152
      %p154 = scmp.ne.s32.totalorder %s146, %s148
      %p155 = scmp.eq.s32.totalorder %s33, 1
      %p156 = por %p154, %p155
      %p157 = scmp.ne.s32.totalorder %s148, %s149
      %p158 = scmp.eq.s32.totalorder %s33, 0
      %p159 = por %p157, %p158
      %p160 = scmp.ne.s32.totalorder %s148, %s149
      %p161 = scmp.eq.s32.totalorder %s34, 1
      %p162 = por %p160, %p161
      %p164 = scmp.ne.s32.totalorder %s149, %s163
      %p165 = scmp.eq.s32.totalorder %s34, 0
      %p166 = por %p164, %p165
      %s168 = sadd.s32 %s167, 1
      %p171 = scmp.eq.s32.totalorder %s28, 1
      %p172 = scmp.ne.s32.totalorder %s167, %s169
      %p173 = scmp.eq.s32.totalorder %s28, 0
      %p174 = por %p172, %p173
      %p175 = scmp.ne.s32.totalorder %s167, %s169
      %p176 = scmp.eq.s32.totalorder %s33, 1
      %p177 = por %p175, %p176
      %p178 = scmp.ne.s32.totalorder %s169, %s170
      %p179 = scmp.eq.s32.totalorder %s33, 0
      %p180 = por %p178, %p179
      %p181 = scmp.ne.s32.totalorder %s169, %s170
      %p182 = scmp.eq.s32.totalorder %s34, 1
      %p183 = por %p181, %p182
      %p185 = scmp.ne.s32.totalorder %s170, %s184
      %p186 = scmp.eq.s32.totalorder %s34, 0
      %p187 = por %p185, %p186
      %s189 = sadd.s32 %s188, 1
      %p192 = scmp.eq.s32.totalorder %s28, 1
      %p193 = scmp.ne.s32.totalorder %s188, %s190
      %p194 = scmp.eq.s32.totalorder %s28, 0
      %p195 = por %p193, %p194
      %p196 = scmp.ne.s32.totalorder %s188, %s190
      %p197 = scmp.eq.s32.totalorder %s33, 1
      %p198 = por %p196, %p197
      %p199 = scmp.ne.s32.totalorder %s190, %s191
      %p200 = scmp.eq.s32.totalorder %s33, 0
      %p201 = por %p199, %p200
      %p202 = scmp.ne.s32.totalorder %s190, %s191
      %p203 = scmp.eq.s32.totalorder %s34, 1
      %p204 = por %p202, %p203
      %p206 = scmp.ne.s32.totalorder %s191, %s205
      %p207 = scmp.eq.s32.totalorder %s34, 0
      %p208 = por %p206, %p207
      %s210 = sadd.s32 %s209, 1
      %p213 = scmp.eq.s32.totalorder %s28, 1
      %p214 = scmp.ne.s32.totalorder %s209, %s211
      %p215 = scmp.eq.s32.totalorder %s28, 0
      %p216 = por %p214, %p215
      %p217 = scmp.ne.s32.totalorder %s209, %s211
      %p218 = scmp.eq.s32.totalorder %s33, 1
      %p219 = por %p217, %p218
      %p220 = scmp.ne.s32.totalorder %s211, %s212
      %p221 = scmp.eq.s32.totalorder %s33, 0
      %p222 = por %p220, %p221
      %p223 = scmp.ne.s32.totalorder %s211, %s212
      %p224 = scmp.eq.s32.totalorder %s34, 1
      %p225 = por %p223, %p224
      %p227 = scmp.ne.s32.totalorder %s212, %s226
      %p228 = scmp.eq.s32.totalorder %s34, 0
      %p229 = por %p227, %p228
      %s231 = sadd.s32 %s230, 1
      %p234 = scmp.eq.s32.totalorder %s28, 1
      %p235 = scmp.ne.s32.totalorder %s230, %s232
      %p236 = scmp.eq.s32.totalorder %s28, 0
      %p237 = por %p235, %p236
      %p238 = scmp.ne.s32.totalorder %s230, %s232
      %p239 = scmp.eq.s32.totalorder %s33, 1
      %p240 = por %p238, %p239
      %p241 = scmp.ne.s32.totalorder %s232, %s233
      %p242 = scmp.eq.s32.totalorder %s33, 0
      %p243 = por %p241, %p242
      %p244 = scmp.ne.s32.totalorder %s232, %s233
      %p245 = scmp.eq.s32.totalorder %s34, 1
      %p246 = por %p244, %p245
      %p248 = scmp.ne.s32.totalorder %s233, %s247
      %p249 = scmp.eq.s32.totalorder %s34, 0
      %p250 = por %p248, %p249
      %s252 = sadd.s32 %s251, 1
      %p255 = scmp.eq.s32.totalorder %s28, 1
      %p256 = scmp.ne.s32.totalorder %s251, %s253
      %p257 = scmp.eq.s32.totalorder %s28, 0
      %p258 = por %p256, %p257
      %p259 = scmp.ne.s32.totalorder %s251, %s253
      %p260 = scmp.eq.s32.totalorder %s33, 1
      %p261 = por %p259, %p260
      %p262 = scmp.ne.s32.totalorder %s253, %s254
      %p263 = scmp.eq.s32.totalorder %s33, 0
      %p264 = por %p262, %p263
      %p265 = scmp.ne.s32.totalorder %s253, %s254
      %p266 = scmp.eq.s32.totalorder %s34, 1
      %p267 = por %p265, %p266
      %p269 = scmp.ne.s32.totalorder %s254, %s268
      %p270 = scmp.eq.s32.totalorder %s34, 0
      %p271 = por %p269, %p270
      %s273 = sadd.s32 %s272, 1
      %p276 = scmp.eq.s32.totalorder %s28, 1
      %p277 = scmp.ne.s32.totalorder %s272, %s274
      %p278 = scmp.eq.s32.totalorder %s28, 0
      %p279 = por %p277, %p278
      %p280 = scmp.ne.s32.totalorder %s272, %s274
      %p281 = scmp.eq.s32.totalorder %s33, 1
      %p282 = por %p280, %p281
      %p283 = scmp.ne.s32.totalorder %s274, %s275
      %p284 = scmp.eq.s32.totalorder %s33, 0
      %p285 = por %p283, %p284
      %p286 = scmp.ne.s32.totalorder %s274, %s275
      %p287 = scmp.eq.s32.totalorder %s34, 1
      %p288 = por %p286, %p287
      %p290 = scmp.ne.s32.totalorder %s275, %s289
      %p291 = scmp.eq.s32.totalorder %s34, 0
      %p292 = por %p290, %p291
      %s294 = sadd.s32 %s293, 1
      %p297 = scmp.eq.s32.totalorder %s28, 1
      %p298 = scmp.ne.s32.totalorder %s293, %s295
      %p299 = scmp.eq.s32.totalorder %s28, 0
      %p300 = por %p298, %p299
      %p301 = scmp.ne.s32.totalorder %s293, %s295
      %p302 = scmp.eq.s32.totalorder %s33, 1
      %p303 = por %p301, %p302
      %p304 = scmp.ne.s32.totalorder %s295, %s296
      %p305 = scmp.eq.s32.totalorder %s33, 0
      %p306 = por %p304, %p305
      %p307 = scmp.ne.s32.totalorder %s295, %s296
      %p308 = scmp.eq.s32.totalorder %s34, 1
      %p309 = por %p307, %p308
      %p311 = scmp.ne.s32.totalorder %s296, %s310
      %p312 = scmp.eq.s32.totalorder %s34, 0
      %p313 = por %p311, %p312
      %s315 = sadd.s32 %s314, 1
      %p318 = scmp.eq.s32.totalorder %s28, 1
      %p319 = scmp.ne.s32.totalorder %s314, %s316
      %p320 = scmp.eq.s32.totalorder %s28, 0
      %p321 = por %p319, %p320
      %p322 = scmp.ne.s32.totalorder %s314, %s316
      %p323 = scmp.eq.s32.totalorder %s33, 1
      %p324 = por %p322, %p323
      %p325 = scmp.ne.s32.totalorder %s316, %s317
      %p326 = scmp.eq.s32.totalorder %s33, 0
      %p327 = por %p325, %p326
      %p328 = scmp.ne.s32.totalorder %s316, %s317
      %p329 = scmp.eq.s32.totalorder %s34, 1
      %p330 = por %p328, %p329
      %p332 = scmp.ne.s32.totalorder %s317, %s331
      %p333 = scmp.eq.s32.totalorder %s34, 0
      %p334 = por %p332, %p333
      %s336 = sadd.s32 %s335, 1
      %p339 = scmp.eq.s32.totalorder %s28, 1
      %p340 = scmp.ne.s32.totalorder %s335, %s337
      %p341 = scmp.eq.s32.totalorder %s28, 0
      %p342 = por %p340, %p341
      %p343 = scmp.ne.s32.totalorder %s335, %s337
      %p344 = scmp.eq.s32.totalorder %s33, 1
      %p345 = por %p343, %p344
      %p346 = scmp.ne.s32.totalorder %s337, %s338
      %p347 = scmp.eq.s32.totalorder %s33, 0
      %p348 = por %p346, %p347
      %p349 = scmp.ne.s32.totalorder %s337, %s338
      %p350 = scmp.eq.s32.totalorder %s34, 1
      %p351 = por %p349, %p350
      %p353 = scmp.ne.s32.totalorder %s338, %s352
      %p354 = scmp.eq.s32.totalorder %s34, 0
      %p355 = por %p353, %p354
      %s357 = sadd.s32 %s356, 1
      %p360 = scmp.eq.s32.totalorder %s28, 1
      %p361 = scmp.ne.s32.totalorder %s356, %s358
      %p362 = scmp.eq.s32.totalorder %s28, 0
      %p363 = por %p361, %p362
      %p364 = scmp.ne.s32.totalorder %s356, %s358
      %p365 = scmp.eq.s32.totalorder %s33, 1
      %p366 = por %p364, %p365
      %p367 = scmp.ne.s32.totalorder %s358, %s359
      %p368 = scmp.eq.s32.totalorder %s33, 0
      %p369 = por %p367, %p368
      %p370 = scmp.ne.s32.totalorder %s358, %s359
      %p371 = scmp.eq.s32.totalorder %s34, 1
      %p372 = por %p370, %p371
      %p374 = scmp.ne.s32.totalorder %s359, %s373
      %p375 = scmp.eq.s32.totalorder %s34, 0
      %p376 = por %p374, %p375
      %s378 = sadd.s32 %s377, 1
      %p381 = scmp.eq.s32.totalorder %s28, 1
      %p382 = scmp.ne.s32.totalorder %s377, %s379
      %p383 = scmp.eq.s32.totalorder %s28, 0
      %p384 = por %p382, %p383
      %p385 = scmp.ne.s32.totalorder %s377, %s379
      %p386 = scmp.eq.s32.totalorder %s33, 1
      %p387 = por %p385, %p386
      %p388 = scmp.ne.s32.totalorder %s379, %s380
      %p389 = scmp.eq.s32.totalorder %s33, 0
      %p390 = por %p388, %p389
      %p391 = scmp.ne.s32.totalorder %s379, %s380
      %p392 = scmp.eq.s32.totalorder %s34, 1
      %p393 = por %p391, %p392
      %p395 = scmp.ne.s32.totalorder %s380, %s394
      %p396 = scmp.eq.s32.totalorder %s34, 0
      %p397 = por %p395, %p396
      %s399 = sadd.s32 %s398, 1
      %p402 = scmp.eq.s32.totalorder %s28, 1
      %p403 = scmp.ne.s32.totalorder %s398, %s400
      %p404 = scmp.eq.s32.totalorder %s28, 0
      %p405 = por %p403, %p404
      %p406 = scmp.ne.s32.totalorder %s398, %s400
      %p407 = scmp.eq.s32.totalorder %s33, 1
      %p408 = por %p406, %p407
      %p409 = scmp.ne.s32.totalorder %s400, %s401
      %p410 = scmp.eq.s32.totalorder %s33, 0
      %p411 = por %p409, %p410
      %p412 = scmp.ne.s32.totalorder %s400, %s401
      %p413 = scmp.eq.s32.totalorder %s34, 1
      %p414 = por %p412, %p413
      %p416 = scmp.ne.s32.totalorder %s401, %s415
      %p417 = scmp.eq.s32.totalorder %s34, 0
      %p418 = por %p416, %p417
      %s420 = sadd.s32 %s419, 1
      %p423 = scmp.eq.s32.totalorder %s28, 1
      %p424 = scmp.ne.s32.totalorder %s419, %s421
      %p425 = scmp.eq.s32.totalorder %s28, 0
      %p426 = por %p424, %p425
      %p427 = scmp.ne.s32.totalorder %s419, %s421
      %p428 = scmp.eq.s32.totalorder %s33, 1
      %p429 = por %p427, %p428
      %p430 = scmp.ne.s32.totalorder %s421, %s422
      %p431 = scmp.eq.s32.totalorder %s33, 0
      %p432 = por %p430, %p431
      %p433 = scmp.ne.s32.totalorder %s421, %s422
      %p434 = scmp.eq.s32.totalorder %s34, 1
      %p435 = por %p433, %p434
      %p437 = scmp.ne.s32.totalorder %s422, %s436
      %p438 = scmp.eq.s32.totalorder %s34, 0
      %p439 = por %p437, %p438
      %s440 = ssub.s32 %s28, %s35
      %p441 = scmp.eq.s32.totalorder %s440, 0
      %s443 = sadd.s32 %s442, 1
      %s444 = scalar_select %p441, %s442, %s443
      %p447 = pneg %p441
      %p448 = scmp.eq.s32.totalorder %s28, 1
      %p449 = por %p447, %p448
      %p450 = scmp.ne.s32.totalorder %s442, %s445
      %p451 = scmp.eq.s32.totalorder %s28, 0
      %p452 = por %p450, %p451
      %p453 = scmp.ne.s32.totalorder %s442, %s445
      %p454 = scmp.eq.s32.totalorder %s33, 1
      %p455 = por %p453, %p454
      %p456 = scmp.ne.s32.totalorder %s445, %s446
      %p457 = scmp.eq.s32.totalorder %s33, 0
      %p458 = por %p456, %p457
      %p459 = scmp.ne.s32.totalorder %s445, %s446
      %p460 = scmp.eq.s32.totalorder %s34, 1
      %p461 = por %p459, %p460
      %p463 = scmp.ne.s32.totalorder %s446, %s462
      %p464 = scmp.eq.s32.totalorder %s34, 0
      %p465 = por %p463, %p464
      %p466 = scmp.le.s32.totalorder 1, %s28
      %p467 = scmp.lt.s32.totalorder %s28, 3
      %p468 = pnand %p466, %p467
      %p469 = pneg %p468
      // Predicated region
      $region9: #{net_forward.1} parent=5 // pred_check
        _
      $region10: #{net_forward.1} parent=5 // pred_check_branch
        %471 = sbr.rel (%p468) target = $region12
      $region11: #{net_forward.1} parent=5 // pred_region
        %s472 = ssub.s32 %s28, 1
        // Predicated region
        $region13: #{net_forward.1} parent=11 // pred_check
          %p473 = pneg %p75
        $region14: #{net_forward.1} parent=11 // pred_check_branch
          %475 = sbr.rel (%p473) target = $region16
        $region15: #{net_forward.1} parent=11 // pred_region
          _
        $region16: #{net_forward.1} parent=11 // pred_fallthru
          _
        // Predicated region
        $region17: #{net_forward.1} parent=11 // pred_check
          %p476 = pneg %p96
        $region18: #{net_forward.1} parent=11 // pred_check_branch
          %478 = sbr.rel (%p476) target = $region20
        $region19: #{net_forward.1} parent=11 // pred_region
          _
        $region20: #{net_forward.1} parent=11 // pred_fallthru
          _
        // Predicated region
        $region21: #{net_forward.1} parent=11 // pred_check
          %p479 = pneg %p117
        $region22: #{net_forward.1} parent=11 // pred_check_branch
          %481 = sbr.rel (%p479) target = $region24
        $region23: #{net_forward.1} parent=11 // pred_region
          _
        $region24: #{net_forward.1} parent=11 // pred_fallthru
          _
        // Predicated region
        $region25: #{net_forward.1} parent=11 // pred_check
          %p482 = pneg %p138
        $region26: #{net_forward.1} parent=11 // pred_check_branch
          %484 = sbr.rel (%p482) target = $region28
        $region27: #{net_forward.1} parent=11 // pred_region
          _
        $region28: #{net_forward.1} parent=11 // pred_fallthru
          _
        // Predicated region
        $region29: #{net_forward.1} parent=11 // pred_check
          %p485 = pneg %p159
        $region30: #{net_forward.1} parent=11 // pred_check_branch
          %487 = sbr.rel (%p485) target = $region32
        $region31: #{net_forward.1} parent=11 // pred_region
          _
        $region32: #{net_forward.1} parent=11 // pred_fallthru
          _
        // Predicated region
        $region33: #{net_forward.1} parent=11 // pred_check
          %p488 = pneg %p180
        $region34: #{net_forward.1} parent=11 // pred_check_branch
          %490 = sbr.rel (%p488) target = $region36
        $region35: #{net_forward.1} parent=11 // pred_region
          _
        $region36: #{net_forward.1} parent=11 // pred_fallthru
          _
        // Predicated region
        $region37: #{net_forward.1} parent=11 // pred_check
          %p491 = pneg %p201
        $region38: #{net_forward.1} parent=11 // pred_check_branch
          %493 = sbr.rel (%p491) target = $region40
        $region39: #{net_forward.1} parent=11 // pred_region
          _
        $region40: #{net_forward.1} parent=11 // pred_fallthru
          _
        // Predicated region
        $region41: #{net_forward.1} parent=11 // pred_check
          %p494 = pneg %p222
        $region42: #{net_forward.1} parent=11 // pred_check_branch
          %496 = sbr.rel (%p494) target = $region44
        $region43: #{net_forward.1} parent=11 // pred_region
          _
        $region44: #{net_forward.1} parent=11 // pred_fallthru
          _
        // Predicated region
        $region45: #{net_forward.1} parent=11 // pred_check
          %p497 = pneg %p243
        $region46: #{net_forward.1} parent=11 // pred_check_branch
          %499 = sbr.rel (%p497) target = $region48
        $region47: #{net_forward.1} parent=11 // pred_region
          _
        $region48: #{net_forward.1} parent=11 // pred_fallthru
          _
        // Predicated region
        $region49: #{net_forward.1} parent=11 // pred_check
          %p500 = pneg %p264
        $region50: #{net_forward.1} parent=11 // pred_check_branch
          %502 = sbr.rel (%p500) target = $region52
        $region51: #{net_forward.1} parent=11 // pred_region
          _
        $region52: #{net_forward.1} parent=11 // pred_fallthru
          _
        // Predicated region
        $region53: #{net_forward.1} parent=11 // pred_check
          %p503 = pneg %p285
        $region54: #{net_forward.1} parent=11 // pred_check_branch
          %505 = sbr.rel (%p503) target = $region56
        $region55: #{net_forward.1} parent=11 // pred_region
          _
        $region56: #{net_forward.1} parent=11 // pred_fallthru
          _
        // Predicated region
        $region57: #{net_forward.1} parent=11 // pred_check
          %p506 = pneg %p306
        $region58: #{net_forward.1} parent=11 // pred_check_branch
          %508 = sbr.rel (%p506) target = $region60
        $region59: #{net_forward.1} parent=11 // pred_region
          _
        $region60: #{net_forward.1} parent=11 // pred_fallthru
          _
        // Predicated region
        $region61: #{net_forward.1} parent=11 // pred_check
          %p509 = pneg %p327
        $region62: #{net_forward.1} parent=11 // pred_check_branch
          %511 = sbr.rel (%p509) target = $region64
        $region63: #{net_forward.1} parent=11 // pred_region
          _
        $region64: #{net_forward.1} parent=11 // pred_fallthru
          _
        // Predicated region
        $region65: #{net_forward.1} parent=11 // pred_check
          %p512 = pneg %p348
        $region66: #{net_forward.1} parent=11 // pred_check_branch
          %514 = sbr.rel (%p512) target = $region68
        $region67: #{net_forward.1} parent=11 // pred_region
          _
        $region68: #{net_forward.1} parent=11 // pred_fallthru
          _
        // Predicated region
        $region69: #{net_forward.1} parent=11 // pred_check
          %p515 = pneg %p369
        $region70: #{net_forward.1} parent=11 // pred_check_branch
          %517 = sbr.rel (%p515) target = $region72
        $region71: #{net_forward.1} parent=11 // pred_region
          _
        $region72: #{net_forward.1} parent=11 // pred_fallthru
          _
        // Predicated region
        $region73: #{net_forward.1} parent=11 // pred_check
          %p518 = pneg %p390
        $region74: #{net_forward.1} parent=11 // pred_check_branch
          %520 = sbr.rel (%p518) target = $region76
        $region75: #{net_forward.1} parent=11 // pred_region
          _
        $region76: #{net_forward.1} parent=11 // pred_fallthru
          _
        // Predicated region
        $region77: #{net_forward.1} parent=11 // pred_check
          %p521 = pneg %p411
        $region78: #{net_forward.1} parent=11 // pred_check_branch
          %523 = sbr.rel (%p521) target = $region80
        $region79: #{net_forward.1} parent=11 // pred_region
          _
        $region80: #{net_forward.1} parent=11 // pred_fallthru
          _
        // Predicated region
        $region81: #{net_forward.1} parent=11 // pred_check
          %p524 = pneg %p432
        $region82: #{net_forward.1} parent=11 // pred_check_branch
          %526 = sbr.rel (%p524) target = $region84
        $region83: #{net_forward.1} parent=11 // pred_region
          _
        $region84: #{net_forward.1} parent=11 // pred_fallthru
          _
      $region12: #{net_forward.1} parent=5 // pred_fallthru
        _
      %p527 = scmp.lt.s32.totalorder %s28, 2
      // Predicated region
      $region85: #{net_forward.1} parent=5 // pred_check
        %p528 = pneg %p527
      $region86: #{net_forward.1} parent=5 // pred_check_branch
        %530 = sbr.rel (%p528) target = $region88
      $region87: #{net_forward.1} parent=5 // pred_region
        // Predicated region
        $region89: #{net_forward.1} parent=87 // pred_check
          %p531 = pneg %p48
        $region90: #{net_forward.1} parent=87 // pred_check_branch
          %533 = sbr.rel (%p531) target = $region92
        $region91: #{net_forward.1} parent=87 // pred_region
          %p534 = scmp.lt.s32.totalorder %s28, 1
          %s535 = scalar_select %p534, %s28, 1
          %s536 = smul.addr %s535, 4
          %s537 = smul.addr %s536, 8
          %s538 = scalar_lea.vmem %s0, %s537
        $region92: #{net_forward.1} parent=87 // pred_fallthru
          _
      $region88: #{net_forward.1} parent=5 // pred_fallthru
        _
      %p539 = scmp.le.s32.totalorder 1, %s28
      %p540 = scmp.lt.s32.totalorder %s28, 3
      %p541 = pnand %p539, %p540
      %p542 = pneg %p541
      // Predicated region
      $region93: #{net_forward.1} parent=5 // pred_check
        _
      $region94: #{net_forward.1} parent=5 // pred_check_branch
        %544 = sbr.rel (%p541) target = $region96
      $region95: #{net_forward.1} parent=5 // pred_region
        %s545 = ssub.s32 %s28, 1
        %p546 = scmp.lt.s32.totalorder %s33, 1
        %s547 = scalar_select %p546, %s33, 1
        %s548 = smul.addr %s547, 4
        %s549 = smul.addr %s548, 8
        %s550 = scalar_lea.vmem %s0, %s549
        %p551 = pneg %p54
        %p552 = pneg %p51
        %p553 = pneg %p75
        %p554 = pneg %p72
        %p555 = pneg %p96
        %p556 = pneg %p93
        %p557 = pneg %p117
        %p558 = pneg %p114
        %p559 = pneg %p138
        %p560 = pneg %p135
        %p561 = pneg %p159
        %p562 = pneg %p156
        %p563 = pneg %p180
        %p564 = pneg %p177
        %p565 = pneg %p201
        %p566 = pneg %p198
        %p567 = pneg %p222
        %p568 = pneg %p219
        %p569 = pneg %p243
        %p570 = pneg %p240
        %p571 = pneg %p264
        %p572 = pneg %p261
        %p573 = pneg %p285
        %p574 = pneg %p282
        %p575 = pneg %p306
        %p576 = pneg %p303
        %p577 = pneg %p327
        %p578 = pneg %p324
        %p579 = pneg %p348
        %p580 = pneg %p345
        %p581 = pneg %p369
        %p582 = pneg %p366
        %p583 = pneg %p390
        %p584 = pneg %p387
        %p585 = pneg %p411
        %p586 = pneg %p408
        %p587 = pneg %p432
        %p588 = pneg %p429
        %p589 = pneg %p458
        %p590 = pneg %p455
        %s591 = sand.u32 %s445, 1
        %s592 = scalar_lea.sflag [#allocation3], %s591
        %s593 = sand.u32 %s445, 1
        %s594 = scalar_lea.vmem [#allocation2], %s593
        %p595 = scmp.lt.s32.totalorder %s33, 1
        %s596 = scalar_select %p595, %s33, 1
        %s597 = smul.addr %s596, 4
        %s598 = smul.addr %s597, 8
        %s599 = scalar_lea.vmem %s0, %s598
        %v600 = vld [vmem:[%s599] sm:$0xff]
        %v601 = vld [vmem:[%s599 + $0x8] sm:$0xff]
        %v602 = vld [vmem:[%s599 + $0x10] sm:$0xff]
        %v603 = vld [vmem:[%s599 + $0x18] sm:$0xff]
        %v604 = vld [vmem:[%s1] sm:$0xff]
        %v605 = vld [vmem:[%s1 + $0x8] sm:$0xff]
        %v606 = vld [vmem:[%s1 + $0x10] sm:$0xff]
        %v607 = vld [vmem:[%s1 + $0x18] sm:$0xff]
        %v608 = vld [vmem:[%s1 + $0x20] sm:$0xff]
        %v609 = vld [vmem:[%s1 + $0x28] sm:$0xff]
        %v610 = vld [vmem:[%s1 + $0x30] sm:$0xff]
        %v611 = vld [vmem:[%s1 + $0x38] sm:$0xff]
        %s612 = scalar_lea.vmem %s1, 64
        %v613 = vld [vmem:[%s612] sm:$0xff]
        %v614 = vld [vmem:[%s612 + $0x8] sm:$0xff]
        %v615 = vld [vmem:[%s612 + $0x10] sm:$0xff]
        %v616 = vld [vmem:[%s612 + $0x18] sm:$0xff]
        %v617 = vld [vmem:[%s612 + $0x20] sm:$0xff]
        %v618 = vld [vmem:[%s612 + $0x28] sm:$0xff]
        %v619 = vld [vmem:[%s612 + $0x30] sm:$0xff]
        %v620 = vld [vmem:[%s612 + $0x38] sm:$0xff]
        %vm625 = vcmask 1046528
        %v626 = vrot.slane %v600, 1
        %v627 = vrot.slane %v601, 1
        %v628 = vsel %vm625, %v626, %v627
        %v629 = vrot.slane %v602, 1
        %v630 = vsel %vm625, %v627, %v629
        %v631 = vrot.slane %v603, 1
        %v632 = vsel %vm625, %v629, %v631
        %vm633 = vcmask 261120
        %v634 = vsel %vm633, %v628, 0
        %v636 = vsel %vm633, %v630, 0
        %v638 = vsel %vm633, %v632, 0
        %v640 = vsel %vm633, %v631, 0
        %642 = vmatpush.msra.mxu0 0.0
        %643 = vmatpush.msra.mxu0 0.0
        %644 = vmatpush.msra.mxu0 0.0
        %645 = vmatpush.msra.mxu0 0.0
        %646 = vmatpush.msra.mxu0 0.0
        %647 = vmatpush.msra.mxu0 0.0
        %648 = vmatpush.msra.mxu0 0.0
        %649 = vmatpush.msra.mxu0 0.0
        %650 = vmatpush.msra.mxu0 0.0
        %651 = vmatpush.msra.mxu0 0.0
        %652 = vmatpush.msra.mxu0 0.0
        %653 = vmatpush.msra.mxu0 0.0
        %654 = vmatpush.msra.mxu0 %v619
        %655 = vmatpush.msra.mxu0 %v617
        %656 = vmatpush.msra.mxu0 %v615
        %657 = vmatpush.msra.mxu0 %v613
        %658 = vmatmul.f32.gmra.mxu0 %v634
        %v659 = vpop.f32.mrf.mxu0
        %v660 = vadd.f32 0.0, %v659
        %661 = vmatmul.f32.gmra.mxu0 %v636
        %v662 = vpop.f32.mrf.mxu0
        %v663 = vadd.f32 0.0, %v662
        %664 = vmatmul.f32.gmra.mxu0 %v638
        %v665 = vpop.f32.mrf.mxu0
        %v666 = vadd.f32 0.0, %v665
        %667 = vmatmul.f32.gmra.mxu0 %v640
        %v668 = vpop.f32.mrf.mxu0
        %v669 = vadd.f32 0.0, %v668
        %670 = vdwg.mxu0
        %671 = vmatpush.msra.mxu0 0.0
        %672 = vmatpush.msra.mxu0 0.0
        %673 = vmatpush.msra.mxu0 0.0
        %674 = vmatpush.msra.mxu0 0.0
        %675 = vmatpush.msra.mxu0 0.0
        %676 = vmatpush.msra.mxu0 0.0
        %677 = vmatpush.msra.mxu0 0.0
        %678 = vmatpush.msra.mxu0 0.0
        %679 = vmatpush.msra.mxu0 0.0
        %680 = vmatpush.msra.mxu0 0.0
        %681 = vmatpush.msra.mxu0 0.0
        %682 = vmatpush.msra.mxu0 0.0
        %683 = vmatpush.msra.mxu0 %v620
        %684 = vmatpush.msra.mxu0 %v618
        %685 = vmatpush.msra.mxu0 %v616
        %686 = vmatpush.msra.mxu0 %v614
        %687 = vmatmul.f32.gmra.mxu0 %v634
        %v688 = vpop.f32.mrf.mxu0
        %v689 = vadd.f32 0.0, %v688
        %690 = vmatmul.f32.gmra.mxu0 %v636
        %v691 = vpop.f32.mrf.mxu0
        %v692 = vadd.f32 0.0, %v691
        %693 = vmatmul.f32.gmra.mxu0 %v638
        %v694 = vpop.f32.mrf.mxu0
        %v695 = vadd.f32 0.0, %v694
        %696 = vmatmul.f32.gmra.mxu0 %v640
        %v697 = vpop.f32.mrf.mxu0
        %v698 = vadd.f32 0.0, %v697
        %699 = vdwg.mxu0
        %v700 = vsel %vm633, %v600, 0
        %v702 = vsel %vm633, %v601, 0
        %v704 = vsel %vm633, %v602, 0
        %v706 = vsel %vm633, %v603, 0
        %708 = vmatpush.msra.mxu0 0.0
        %709 = vmatpush.msra.mxu0 0.0
        %710 = vmatpush.msra.mxu0 0.0
        %711 = vmatpush.msra.mxu0 0.0
        %712 = vmatpush.msra.mxu0 0.0
        %713 = vmatpush.msra.mxu0 0.0
        %714 = vmatpush.msra.mxu0 0.0
        %715 = vmatpush.msra.mxu0 0.0
        %716 = vmatpush.msra.mxu0 0.0
        %717 = vmatpush.msra.mxu0 0.0
        %718 = vmatpush.msra.mxu0 0.0
        %719 = vmatpush.msra.mxu0 0.0
        %720 = vmatpush.msra.mxu0 %v610
        %721 = vmatpush.msra.mxu0 %v608
        %722 = vmatpush.msra.mxu0 %v606
        %723 = vmatpush.msra.mxu0 %v604
        %724 = vmatmul.f32.gmra.mxu0 %v700
        %v725 = vpop.f32.mrf.mxu0
        %v726 = vadd.f32 %v660, %v725
        %727 = vmatmul.f32.gmra.mxu0 %v702
        %v728 = vpop.f32.mrf.mxu0
        %v729 = vadd.f32 %v663, %v728
        %730 = vmatmul.f32.gmra.mxu0 %v704
        %v731 = vpop.f32.mrf.mxu0
        %v732 = vadd.f32 %v666, %v731
        %733 = vmatmul.f32.gmra.mxu0 %v706
        %v734 = vpop.f32.mrf.mxu0
        %v735 = vadd.f32 %v669, %v734
        %736 = vdwg.mxu0
        %737 = vmatpush.msra.mxu0 0.0
        %738 = vmatpush.msra.mxu0 0.0
        %739 = vmatpush.msra.mxu0 0.0
        %740 = vmatpush.msra.mxu0 0.0
        %741 = vmatpush.msra.mxu0 0.0
        %742 = vmatpush.msra.mxu0 0.0
        %743 = vmatpush.msra.mxu0 0.0
        %744 = vmatpush.msra.mxu0 0.0
        %745 = vmatpush.msra.mxu0 0.0
        %746 = vmatpush.msra.mxu0 0.0
        %747 = vmatpush.msra.mxu0 0.0
        %748 = vmatpush.msra.mxu0 0.0
        %749 = vmatpush.msra.mxu0 %v611
        %750 = vmatpush.msra.mxu0 %v609
        %751 = vmatpush.msra.mxu0 %v607
        %752 = vmatpush.msra.mxu0 %v605
        %753 = vmatmul.f32.gmra.mxu0 %v700
        %v754 = vpop.f32.mrf.mxu0
        %v755 = vadd.f32 %v689, %v754
        %756 = vmatmul.f32.gmra.mxu0 %v702
        %v757 = vpop.f32.mrf.mxu0
        %v758 = vadd.f32 %v692, %v757
        %759 = vmatmul.f32.gmra.mxu0 %v704
        %v760 = vpop.f32.mrf.mxu0
        %v761 = vadd.f32 %v695, %v760
        %762 = vmatmul.f32.gmra.mxu0 %v706
        %v763 = vpop.f32.mrf.mxu0
        %v764 = vadd.f32 %v698, %v763
        %765 = vdwg.mxu0
        %s766 = scalar_lea.vmem %s1, 128
        %v767 = vld [vmem:[%s766] sm:$0xff]
        %v768 = vld [vmem:[%s766 + $0x8] sm:$0xff]
        %v769 = vld [vmem:[%s766 + $0x10] sm:$0xff]
        %v770 = vld [vmem:[%s766 + $0x18] sm:$0xff]
        %v771 = vld [vmem:[%s766 + $0x20] sm:$0xff]
        %v772 = vld [vmem:[%s766 + $0x28] sm:$0xff]
        %v773 = vld [vmem:[%s766 + $0x30] sm:$0xff]
        %v774 = vld [vmem:[%s766 + $0x38] sm:$0xff]
        %vm775 = vcmask 1045504
        %v776 = vrot.slane %v600, 2
        %v777 = vrot.slane %v601, 2
        %v778 = vsel %vm775, %v776, %v777
        %v779 = vrot.slane %v602, 2
        %v780 = vsel %vm775, %v777, %v779
        %v781 = vrot.slane %v603, 2
        %v782 = vsel %vm775, %v779, %v781
        %v783 = vsel %vm633, %v778, 0
        %v785 = vsel %vm633, %v780, 0
        %v787 = vsel %vm633, %v782, 0
        %v789 = vsel %vm633, %v781, 0
        %791 = vmatpush.msra.mxu0 0.0
        %792 = vmatpush.msra.mxu0 0.0
        %793 = vmatpush.msra.mxu0 0.0
        %794 = vmatpush.msra.mxu0 0.0
        %795 = vmatpush.msra.mxu0 0.0
        %796 = vmatpush.msra.mxu0 0.0
        %797 = vmatpush.msra.mxu0 0.0
        %798 = vmatpush.msra.mxu0 0.0
        %799 = vmatpush.msra.mxu0 0.0
        %800 = vmatpush.msra.mxu0 0.0
        %801 = vmatpush.msra.mxu0 0.0
        %802 = vmatpush.msra.mxu0 0.0
        %803 = vmatpush.msra.mxu0 %v773
        %804 = vmatpush.msra.mxu0 %v771
        %805 = vmatpush.msra.mxu0 %v769
        %806 = vmatpush.msra.mxu0 %v767
        %807 = vmatmul.f32.gmra.mxu0 %v783
        %v808 = vpop.f32.mrf.mxu0
        %v809 = vadd.f32 0.0, %v808
        %810 = vmatmul.f32.gmra.mxu0 %v785
        %v811 = vpop.f32.mrf.mxu0
        %v812 = vadd.f32 0.0, %v811
        %813 = vmatmul.f32.gmra.mxu0 %v787
        %v814 = vpop.f32.mrf.mxu0
        %v815 = vadd.f32 0.0, %v814
        %816 = vmatmul.f32.gmra.mxu0 %v789
        %v817 = vpop.f32.mrf.mxu0
        %v818 = vadd.f32 0.0, %v817
        %819 = vdwg.mxu0
        %820 = vmatpush.msra.mxu0 0.0
        %821 = vmatpush.msra.mxu0 0.0
        %822 = vmatpush.msra.mxu0 0.0
        %823 = vmatpush.msra.mxu0 0.0
        %824 = vmatpush.msra.mxu0 0.0
        %825 = vmatpush.msra.mxu0 0.0
        %826 = vmatpush.msra.mxu0 0.0
        %827 = vmatpush.msra.mxu0 0.0
        %828 = vmatpush.msra.mxu0 0.0
        %829 = vmatpush.msra.mxu0 0.0
        %830 = vmatpush.msra.mxu0 0.0
        %831 = vmatpush.msra.mxu0 0.0
        %832 = vmatpush.msra.mxu0 %v774
        %833 = vmatpush.msra.mxu0 %v772
        %834 = vmatpush.msra.mxu0 %v770
        %835 = vmatpush.msra.mxu0 %v768
        %836 = vmatmul.f32.gmra.mxu0 %v783
        %v837 = vpop.f32.mrf.mxu0
        %v838 = vadd.f32 0.0, %v837
        %839 = vmatmul.f32.gmra.mxu0 %v785
        %v840 = vpop.f32.mrf.mxu0
        %v841 = vadd.f32 0.0, %v840
        %842 = vmatmul.f32.gmra.mxu0 %v787
        %v843 = vpop.f32.mrf.mxu0
        %v844 = vadd.f32 0.0, %v843
        %845 = vmatmul.f32.gmra.mxu0 %v789
        %v846 = vpop.f32.mrf.mxu0
        %v847 = vadd.f32 0.0, %v846
        %848 = vdwg.mxu0
        %v849 = vadd.f32 %v726, %v809
        %v850 = vadd.f32 %v755, %v838
        %v851 = vadd.f32 %v729, %v812
        %v852 = vadd.f32 %v758, %v841
        %v853 = vadd.f32 %v732, %v815
        %v854 = vadd.f32 %v761, %v844
        %v855 = vadd.f32 %v735, %v818
        %v856 = vadd.f32 %v764, %v847
        %v857 = vld [vmem:[%s2] sm:$0x3]
        %v859 = vperm.slane %v857, 0
        %v860 = vperm.slane %v857, 1
        %v863 = vadd.f32 %v849, %v859
        %v864 = vadd.f32 %v850, %v860
        %v865 = vadd.f32 %v851, %v859
        %v866 = vadd.f32 %v852, %v860
        %v867 = vadd.f32 %v853, %v859
        %v868 = vadd.f32 %v854, %v860
        %v869 = vadd.f32 %v855, %v859
        %v870 = vadd.f32 %v856, %v860
        %v871 = vmax.f32 %v863, 0.0
        %v872 = vmax.f32 %v864, 0.0
        %v873 = vmax.f32 %v865, 0.0
        %v874 = vmax.f32 %v866, 0.0
        %v875 = vmax.f32 %v867, 0.0
        %v876 = vmax.f32 %v868, 0.0
        %v877 = vmax.f32 %v869, 0.0
        %v878 = vmax.f32 %v870, 0.0
        %v879 = vld [vmem:[%s3] sm:$0xff]
        %v880 = vld [vmem:[%s3 + $0x8] sm:$0x7f]
        %vm881 = vcmask 244736
        %v883 = vsel %vm881, %v879, 0
        %v886 = vsel %vm881, %v880, 0
        %v889 = vsel %vm775, %v877, 0
        %v892 = vsel %vm775, %v878, 0
        %894 = vmatpush.msra.mxu0 0.0
        %895 = vmatpush.msra.mxu0 0.0
        %896 = vmatpush.msra.mxu0 0.0
        %897 = vmatpush.msra.mxu0 0.0
        %898 = vmatpush.msra.mxu0 0.0
        %899 = vmatpush.msra.mxu0 0.0
        %900 = vmatpush.msra.mxu0 0.0
        %901 = vmatpush.msra.mxu0 0.0
        %902 = vmatpush.msra.mxu0 0.0
        %903 = vmatpush.msra.mxu0 0.0
        %904 = vmatpush.msra.mxu0 0.0
        %905 = vmatpush.msra.mxu0 0.0
        %906 = vmatpush.msra.mxu0 %v889
        %907 = vmatpush.msra.mxu0 %v875
        %908 = vmatpush.msra.mxu0 %v873
        %909 = vmatpush.msra.mxu0 %v871
        %910 = vmatmul.f32.gmra.mxu0 %v883
        %v911 = vpop.f32.mrf.mxu0
        %v912 = vadd.f32 0.0, %v911
        %913 = vmatmul.f32.gmra.mxu0 %v886
        %v914 = vpop.f32.mrf.mxu0
        %v915 = vadd.f32 0.0, %v914
        %916 = vdwg.mxu0
        %917 = vmatpush.msra.mxu0 0.0
        %918 = vmatpush.msra.mxu0 0.0
        %919 = vmatpush.msra.mxu0 0.0
        %920 = vmatpush.msra.mxu0 0.0
        %921 = vmatpush.msra.mxu0 0.0
        %922 = vmatpush.msra.mxu0 0.0
        %923 = vmatpush.msra.mxu0 0.0
        %924 = vmatpush.msra.mxu0 0.0
        %925 = vmatpush.msra.mxu0 0.0
        %926 = vmatpush.msra.mxu0 0.0
        %927 = vmatpush.msra.mxu0 0.0
        %928 = vmatpush.msra.mxu0 0.0
        %929 = vmatpush.msra.mxu0 %v892
        %930 = vmatpush.msra.mxu0 %v876
        %931 = vmatpush.msra.mxu0 %v874
        %932 = vmatpush.msra.mxu0 %v872
        %933 = vmatmul.f32.gmra.mxu0 %v883
        %v934 = vpop.f32.mrf.mxu0
        %v935 = vadd.f32 0.0, %v934
        %936 = vmatmul.f32.gmra.mxu0 %v886
        %v937 = vpop.f32.mrf.mxu0
        %v938 = vadd.f32 0.0, %v937
        %939 = vdwg.mxu0
        %v940 = vld [vmem:[%s4] sm:$0xff]
        %v941 = vld [vmem:[%s4 + $0x8] sm:$0x7f]
        %v943 = vsel %vm881, %v940, 0
        %v946 = vsel %vm881, %v941, 0
        %948 = vmatpush.msra.mxu0 0.0
        %949 = vmatpush.msra.mxu0 0.0
        %950 = vmatpush.msra.mxu0 0.0
        %951 = vmatpush.msra.mxu0 0.0
        %952 = vmatpush.msra.mxu0 0.0
        %953 = vmatpush.msra.mxu0 0.0
        %954 = vmatpush.msra.mxu0 0.0
        %955 = vmatpush.msra.mxu0 0.0
        %956 = vmatpush.msra.mxu0 0.0
        %957 = vmatpush.msra.mxu0 0.0
        %958 = vmatpush.msra.mxu0 0.0
        %959 = vmatpush.msra.mxu0 0.0
        %960 = vmatpush.msra.mxu0 %v889
        %961 = vmatpush.msra.mxu0 %v875
        %962 = vmatpush.msra.mxu0 %v873
        %963 = vmatpush.msra.mxu0 %v871
        %964 = vmatmul.f32.gmra.mxu0 %v943
        %v965 = vpop.f32.mrf.mxu0
        %v966 = vadd.f32 0.0, %v965
        %967 = vmatmul.f32.gmra.mxu0 %v946
        %v968 = vpop.f32.mrf.mxu0
        %v969 = vadd.f32 0.0, %v968
        %970 = vdwg.mxu0
        %971 = vmatpush.msra.mxu0 0.0
        %972 = vmatpush.msra.mxu0 0.0
        %973 = vmatpush.msra.mxu0 0.0
        %974 = vmatpush.msra.mxu0 0.0
        %975 = vmatpush.msra.mxu0 0.0
        %976 = vmatpush.msra.mxu0 0.0
        %977 = vmatpush.msra.mxu0 0.0
        %978 = vmatpush.msra.mxu0 0.0
        %979 = vmatpush.msra.mxu0 0.0
        %980 = vmatpush.msra.mxu0 0.0
        %981 = vmatpush.msra.mxu0 0.0
        %982 = vmatpush.msra.mxu0 0.0
        %983 = vmatpush.msra.mxu0 %v892
        %984 = vmatpush.msra.mxu0 %v876
        %985 = vmatpush.msra.mxu0 %v874
        %986 = vmatpush.msra.mxu0 %v872
        %987 = vmatmul.f32.gmra.mxu0 %v943
        %v988 = vpop.f32.mrf.mxu0
        %v989 = vadd.f32 0.0, %v988
        %990 = vmatmul.f32.gmra.mxu0 %v946
        %v991 = vpop.f32.mrf.mxu0
        %v992 = vadd.f32 0.0, %v991
        %993 = vdwg.mxu0
        %v994 = vmax.f32 %v912, %v966
        %v995 = vmax.f32 %v935, %v989
        %v996 = vmax.f32 %v915, %v969
        %v997 = vmax.f32 %v938, %v992
        %v998 = vld [vmem:[%s5] sm:$0xff]
        %v999 = vld [vmem:[%s5 + $0x8] sm:$0xff]
        %v1000 = vld [vmem:[%s5 + $0x10] sm:$0xff]
        %v1001 = vld [vmem:[%s5 + $0x18] sm:$0xff]
        %v1002 = vld [vmem:[%s5 + $0x20] sm:$0xff]
        %v1003 = vld [vmem:[%s5 + $0x28] sm:$0xff]
        %v1004 = vld [vmem:[%s5 + $0x30] sm:$0xff]
        %v1005 = vld [vmem:[%s5 + $0x38] sm:$0xff]
        %v1006 = vld [vmem:[%s5 + $0x40] sm:$0xff]
        %v1007 = vld [vmem:[%s5 + $0x48] sm:$0xff]
        %v1008 = vld [vmem:[%s5 + $0x50] sm:$0xff]
        %v1009 = vld [vmem:[%s5 + $0x58] sm:$0xff]
        %v1010 = vld [vmem:[%s5 + $0x60] sm:$0xff]
        %v1011 = vld [vmem:[%s5 + $0x68] sm:$0xff]
        %v1012 = vld [vmem:[%s5 + $0x70] sm:$0xff]
        %v1013 = vld [vmem:[%s5 + $0x78] sm:$0xff]
        %v1014 = vld [vmem:[%s5 + $0x80] sm:$0xff]
        %v1015 = vld [vmem:[%s5 + $0x88] sm:$0xff]
        %v1016 = vld [vmem:[%s5 + $0x90] sm:$0xff]
        %v1017 = vld [vmem:[%s5 + $0x98] sm:$0xff]
        %v1018 = vld [vmem:[%s5 + $0xa0] sm:$0xff]
        %v1019 = vld [vmem:[%s5 + $0xa8] sm:$0xff]
        %v1020 = vld [vmem:[%s5 + $0xb0] sm:$0xff]
        %v1021 = vld [vmem:[%s5 + $0xb8] sm:$0xff]
        %v1022 = vld [vmem:[%s5 + $0xc0] sm:$0xff]
        %v1023 = vld [vmem:[%s5 + $0xc8] sm:$0xff]
        %v1024 = vld [vmem:[%s5 + $0xd0] sm:$0xff]
        %v1025 = vld [vmem:[%s5 + $0xd8] sm:$0xff]
        %v1026 = vld [vmem:[%s5 + $0xe0] sm:$0xff]
        %v1027 = vld [vmem:[%s5 + $0xe8] sm:$0xff]
        %vm1028 = vcmask 916480
        %v1030 = vsel %vm1028, %v995, 0
        %v1033 = vsel %vm1028, %v997, 0
        %1035 = vmatpush.msra.mxu0 %v1013
        %1036 = vmatpush.msra.mxu0 %v1012
        %1037 = vmatpush.msra.mxu0 %v1011
        %1038 = vmatpush.msra.mxu0 %v1010
        %1039 = vmatpush.msra.mxu0 %v1009
        %1040 = vmatpush.msra.mxu0 %v1008
        %1041 = vmatpush.msra.mxu0 %v1007
        %1042 = vmatpush.msra.mxu0 %v1006
        %1043 = vmatpush.msra.mxu0 %v1005
        %1044 = vmatpush.msra.mxu0 %v1004
        %1045 = vmatpush.msra.mxu0 %v1003
        %1046 = vmatpush.msra.mxu0 %v1002
        %1047 = vmatpush.msra.mxu0 %v1001
        %1048 = vmatpush.msra.mxu0 %v1000
        %1049 = vmatpush.msra.mxu0 %v999
        %1050 = vmatpush.msra.mxu0 %v998
        %1051 = vmatmul.f32.gmra.mxu0 %v994
        %v1052 = vpop.f32.mrf.mxu0
        %v1053 = vadd.f32 0.0, %v1052
        %1054 = vmatmul.f32.gmra.mxu0 %v996
        %v1055 = vpop.f32.mrf.mxu0
        %v1056 = vadd.f32 0.0, %v1055
        %1057 = vdwg.mxu0
        %1058 = vmatpush.msra.mxu0 0.0
        %1059 = vmatpush.msra.mxu0 0.0
        %1060 = vmatpush.msra.mxu0 %v1027
        %1061 = vmatpush.msra.mxu0 %v1026
        %1062 = vmatpush.msra.mxu0 %v1025
        %1063 = vmatpush.msra.mxu0 %v1024
        %1064 = vmatpush.msra.mxu0 %v1023
        %1065 = vmatpush.msra.mxu0 %v1022
        %1066 = vmatpush.msra.mxu0 %v1021
        %1067 = vmatpush.msra.mxu0 %v1020
        %1068 = vmatpush.msra.mxu0 %v1019
        %1069 = vmatpush.msra.mxu0 %v1018
        %1070 = vmatpush.msra.mxu0 %v1017
        %1071 = vmatpush.msra.mxu0 %v1016
        %1072 = vmatpush.msra.mxu0 %v1015
        %1073 = vmatpush.msra.mxu0 %v1014
        %1074 = vmatmul.f32.gmra.mxu0 %v1030
        %v1075 = vpop.f32.mrf.mxu0
        %v1076 = vadd.f32 %v1053, %v1075
        %1077 = vmatmul.f32.gmra.mxu0 %v1033
        %v1078 = vpop.f32.mrf.mxu0
        %v1079 = vadd.f32 %v1056, %v1078
        %1080 = vdwg.mxu0
        %v1081 = vld [vmem:[%s6] sm:$0xff]
        %v1082 = vld [vmem:[%s6 + $0x8] sm:$0xff]
        %v1083 = vld [vmem:[%s6 + $0x10] sm:$0xff]
        %v1084 = vld [vmem:[%s6 + $0x18] sm:$0xff]
        %v1085 = vld [vmem:[%s6 + $0x20] sm:$0xff]
        %v1086 = vld [vmem:[%s6 + $0x28] sm:$0xff]
        %v1087 = vld [vmem:[%s6 + $0x30] sm:$0xff]
        %v1088 = vld [vmem:[%s6 + $0x38] sm:$0xff]
        %v1089 = vld [vmem:[%s6 + $0x40] sm:$0xff]
        %v1090 = vld [vmem:[%s6 + $0x48] sm:$0xff]
        %v1091 = vld [vmem:[%s6 + $0x50] sm:$0xff]
        %v1092 = vld [vmem:[%s6 + $0x58] sm:$0xff]
        %v1093 = vld [vmem:[%s6 + $0x60] sm:$0xff]
        %v1094 = vld [vmem:[%s6 + $0x68] sm:$0xff]
        %v1095 = vld [vmem:[%s6 + $0x70] sm:$0xff]
        %v1096 = vld [vmem:[%s6 + $0x78] sm:$0xff]
        %v1097 = vld [vmem:[%s6 + $0x80] sm:$0xff]
        %v1098 = vld [vmem:[%s6 + $0x88] sm:$0xff]
        %v1099 = vld [vmem:[%s6 + $0x90] sm:$0xff]
        %v1100 = vld [vmem:[%s6 + $0x98] sm:$0xff]
        %v1101 = vld [vmem:[%s6 + $0xa0] sm:$0xff]
        %v1102 = vld [vmem:[%s6 + $0xa8] sm:$0xff]
        %v1103 = vld [vmem:[%s6 + $0xb0] sm:$0xff]
        %v1104 = vld [vmem:[%s6 + $0xb8] sm:$0xff]
        %v1105 = vld [vmem:[%s6 + $0xc0] sm:$0xff]
        %v1106 = vld [vmem:[%s6 + $0xc8] sm:$0xff]
        %v1107 = vld [vmem:[%s6 + $0xd0] sm:$0xff]
        %v1108 = vld [vmem:[%s6 + $0xd8] sm:$0xff]
        %v1109 = vld [vmem:[%s6 + $0xe0] sm:$0xff]
        %v1110 = vld [vmem:[%s6 + $0xe8] sm:$0xff]
        %1111 = vmatpush.msra.mxu0 %v1096
        %1112 = vmatpush.msra.mxu0 %v1095
        %1113 = vmatpush.msra.mxu0 %v1094
        %1114 = vmatpush.msra.mxu0 %v1093
        %1115 = vmatpush.msra.mxu0 %v1092
        %1116 = vmatpush.msra.mxu0 %v1091
        %1117 = vmatpush.msra.mxu0 %v1090
        %1118 = vmatpush.msra.mxu0 %v1089
        %1119 = vmatpush.msra.mxu0 %v1088
        %1120 = vmatpush.msra.mxu0 %v1087
        %1121 = vmatpush.msra.mxu0 %v1086
        %1122 = vmatpush.msra.mxu0 %v1085
        %1123 = vmatpush.msra.mxu0 %v1084
        %1124 = vmatpush.msra.mxu0 %v1083
        %1125 = vmatpush.msra.mxu0 %v1082
        %1126 = vmatpush.msra.mxu0 %v1081
        %1127 = vmatmul.f32.gmra.mxu0 %v994
        %v1128 = vpop.f32.mrf.mxu0
        %v1129 = vadd.f32 0.0, %v1128
        %1130 = vmatmul.f32.gmra.mxu0 %v996
        %v1131 = vpop.f32.mrf.mxu0
        %v1132 = vadd.f32 0.0, %v1131
        %1133 = vdwg.mxu0
        %1134 = vmatpush.msra.mxu0 0.0
        %1135 = vmatpush.msra.mxu0 0.0
        %1136 = vmatpush.msra.mxu0 %v1110
        %1137 = vmatpush.msra.mxu0 %v1109
        %1138 = vmatpush.msra.mxu0 %v1108
        %1139 = vmatpush.msra.mxu0 %v1107
        %1140 = vmatpush.msra.mxu0 %v1106
        %1141 = vmatpush.msra.mxu0 %v1105
        %1142 = vmatpush.msra.mxu0 %v1104
        %1143 = vmatpush.msra.mxu0 %v1103
        %1144 = vmatpush.msra.mxu0 %v1102
        %1145 = vmatpush.msra.mxu0 %v1101
        %1146 = vmatpush.msra.mxu0 %v1100
        %1147 = vmatpush.msra.mxu0 %v1099
        %1148 = vmatpush.msra.mxu0 %v1098
        %1149 = vmatpush.msra.mxu0 %v1097
        %1150 = vmatmul.f32.gmra.mxu0 %v1030
        %v1151 = vpop.f32.mrf.mxu0
        %v1152 = vadd.f32 %v1129, %v1151
        %1153 = vmatmul.f32.gmra.mxu0 %v1033
        %v1154 = vpop.f32.mrf.mxu0
        %v1155 = vadd.f32 %v1132, %v1154
        %1156 = vdwg.mxu0
        %v1157 = vmax.f32 %v1076, %v1152
        %v1158 = vmax.f32 %v1079, %v1155
        %v1159 = vld [vmem:[%s7] sm:$0xff]
        %v1160 = vld [vmem:[%s7 + $0x8] sm:$0xff]
        %v1161 = vld [vmem:[%s7 + $0x10] sm:$0xff]
        %v1162 = vld [vmem:[%s7 + $0x18] sm:$0xff]
        %v1163 = vld [vmem:[%s7 + $0x20] sm:$0xff]
        %v1164 = vld [vmem:[%s7 + $0x28] sm:$0xff]
        %v1165 = vld [vmem:[%s7 + $0x30] sm:$0xff]
        %v1166 = vld [vmem:[%s7 + $0x38] sm:$0xff]
        %v1167 = vld [vmem:[%s7 + $0x40] sm:$0xff]
        %v1168 = vld [vmem:[%s7 + $0x48] sm:$0xff]
        %v1169 = vld [vmem:[%s7 + $0x50] sm:$0xff]
        %v1170 = vld [vmem:[%s7 + $0x58] sm:$0xff]
        %v1171 = vld [vmem:[%s7 + $0x60] sm:$0xff]
        %v1172 = vld [vmem:[%s7 + $0x68] sm:$0xff]
        %v1173 = vld [vmem:[%s7 + $0x70] sm:$0xff]
        %v1174 = vld [vmem:[%s7 + $0x78] sm:$0xff]
        %v1175 = vld [vmem:[%s7 + $0x80] sm:$0xff]
        %v1176 = vld [vmem:[%s7 + $0x88] sm:$0xff]
        %v1177 = vld [vmem:[%s7 + $0x90] sm:$0xff]
        %v1178 = vld [vmem:[%s7 + $0x98] sm:$0xff]
        %v1179 = vld [vmem:[%s7 + $0xa0] sm:$0xff]
        %v1180 = vld [vmem:[%s7 + $0xa8] sm:$0xff]
        %v1181 = vld [vmem:[%s7 + $0xb0] sm:$0xff]
        %v1182 = vld [vmem:[%s7 + $0xb8] sm:$0xff]
        %v1183 = vld [vmem:[%s7 + $0xc0] sm:$0xff]
        %v1184 = vld [vmem:[%s7 + $0xc8] sm:$0xff]
        %v1185 = vld [vmem:[%s7 + $0xd0] sm:$0xff]
        %v1186 = vld [vmem:[%s7 + $0xd8] sm:$0xff]
        %v1187 = vld [vmem:[%s7 + $0xe0] sm:$0xff]
        %v1188 = vld [vmem:[%s7 + $0xe8] sm:$0xff]
        %s1189 = scalar_lea.vmem %s7, 240
        %v1190 = vld [vmem:[%s1189] sm:$0xff]
        %v1191 = vld [vmem:[%s1189 + $0x8] sm:$0xff]
        %v1192 = vld [vmem:[%s1189 + $0x10] sm:$0xff]
        %v1193 = vld [vmem:[%s1189 + $0x18] sm:$0xff]
        %v1194 = vld [vmem:[%s1189 + $0x20] sm:$0xff]
        %v1195 = vld [vmem:[%s1189 + $0x28] sm:$0xff]
        %v1196 = vld [vmem:[%s1189 + $0x30] sm:$0xff]
        %v1197 = vld [vmem:[%s1189 + $0x38] sm:$0xff]
        %v1198 = vld [vmem:[%s1189 + $0x40] sm:$0xff]
        %v1199 = vld [vmem:[%s1189 + $0x48] sm:$0xff]
        %v1200 = vld [vmem:[%s1189 + $0x50] sm:$0xff]
        %v1201 = vld [vmem:[%s1189 + $0x58] sm:$0xff]
        %v1202 = vld [vmem:[%s1189 + $0x60] sm:$0xff]
        %v1203 = vld [vmem:[%s1189 + $0x68] sm:$0xff]
        %v1204 = vld [vmem:[%s1189 + $0x70] sm:$0xff]
        %v1205 = vld [vmem:[%s1189 + $0x78] sm:$0xff]
        %v1206 = vld [vmem:[%s1189 + $0x80] sm:$0xff]
        %v1207 = vld [vmem:[%s1189 + $0x88] sm:$0xff]
        %v1208 = vld [vmem:[%s1189 + $0x90] sm:$0xff]
        %v1209 = vld [vmem:[%s1189 + $0x98] sm:$0xff]
        %v1210 = vld [vmem:[%s1189 + $0xa0] sm:$0xff]
        %v1211 = vld [vmem:[%s1189 + $0xa8] sm:$0xff]
        %v1212 = vld [vmem:[%s1189 + $0xb0] sm:$0xff]
        %v1213 = vld [vmem:[%s1189 + $0xb8] sm:$0xff]
        %v1214 = vld [vmem:[%s1189 + $0xc0] sm:$0xff]
        %v1215 = vld [vmem:[%s1189 + $0xc8] sm:$0xff]
        %v1216 = vld [vmem:[%s1189 + $0xd0] sm:$0xff]
        %v1217 = vld [vmem:[%s1189 + $0xd8] sm:$0xff]
        %v1218 = vld [vmem:[%s1189 + $0xe0] sm:$0xff]
        %v1219 = vld [vmem:[%s1189 + $0xe8] sm:$0xff]
        %v1222 = vrot.slane %v1157, 1
        %v1223 = vrot.slane %v1158, 1
        %v1224 = vsel %vm625, %v1222, %v1223
        %vm1225 = vcmask 982016
        %v1226 = vsel %vm1225, %v1224, 0
        %v1228 = vsel %vm1225, %v1223, 0
        %1230 = vmatpush.msra.mxu0 0.0
        %1231 = vmatpush.msra.mxu0 %v1218
        %1232 = vmatpush.msra.mxu0 %v1216
        %1233 = vmatpush.msra.mxu0 %v1214
        %1234 = vmatpush.msra.mxu0 %v1212
        %1235 = vmatpush.msra.mxu0 %v1210
        %1236 = vmatpush.msra.mxu0 %v1208
        %1237 = vmatpush.msra.mxu0 %v1206
        %1238 = vmatpush.msra.mxu0 %v1204
        %1239 = vmatpush.msra.mxu0 %v1202
        %1240 = vmatpush.msra.mxu0 %v1200
        %1241 = vmatpush.msra.mxu0 %v1198
        %1242 = vmatpush.msra.mxu0 %v1196
        %1243 = vmatpush.msra.mxu0 %v1194
        %1244 = vmatpush.msra.mxu0 %v1192
        %1245 = vmatpush.msra.mxu0 %v1190
        %1246 = vmatmul.f32.gmra.mxu0 %v1226
        %v1247 = vpop.f32.mrf.mxu0
        %v1248 = vadd.f32 0.0, %v1247
        %1249 = vmatmul.f32.gmra.mxu0 %v1228
        %v1250 = vpop.f32.mrf.mxu0
        %v1251 = vadd.f32 0.0, %v1250
        %1252 = vdwg.mxu0
        %1253 = vmatpush.msra.mxu0 0.0
        %1254 = vmatpush.msra.mxu0 %v1219
        %1255 = vmatpush.msra.mxu0 %v1217
        %1256 = vmatpush.msra.mxu0 %v1215
        %1257 = vmatpush.msra.mxu0 %v1213
        %1258 = vmatpush.msra.mxu0 %v1211
        %1259 = vmatpush.msra.mxu0 %v1209
        %1260 = vmatpush.msra.mxu0 %v1207
        %1261 = vmatpush.msra.mxu0 %v1205
        %1262 = vmatpush.msra.mxu0 %v1203
        %1263 = vmatpush.msra.mxu0 %v1201
        %1264 = vmatpush.msra.mxu0 %v1199
        %1265 = vmatpush.msra.mxu0 %v1197
        %1266 = vmatpush.msra.mxu0 %v1195
        %1267 = vmatpush.msra.mxu0 %v1193
        %1268 = vmatpush.msra.mxu0 %v1191
        %1269 = vmatmul.f32.gmra.mxu0 %v1226
        %v1270 = vpop.f32.mrf.mxu0
        %v1271 = vadd.f32 0.0, %v1270
        %1272 = vmatmul.f32.gmra.mxu0 %v1228
        %v1273 = vpop.f32.mrf.mxu0
        %v1274 = vadd.f32 0.0, %v1273
        %1275 = vdwg.mxu0
        %v1276 = vsel %vm1225, %v1157, 0
        %v1278 = vsel %vm1225, %v1158, 0
        %1280 = vmatpush.msra.mxu0 0.0
        %1281 = vmatpush.msra.mxu0 %v1187
        %1282 = vmatpush.msra.mxu0 %v1185
        %1283 = vmatpush.msra.mxu0 %v1183
        %1284 = vmatpush.msra.mxu0 %v1181
        %1285 = vmatpush.msra.mxu0 %v1179
        %1286 = vmatpush.msra.mxu0 %v1177
        %1287 = vmatpush.msra.mxu0 %v1175
        %1288 = vmatpush.msra.mxu0 %v1173
        %1289 = vmatpush.msra.mxu0 %v1171
        %1290 = vmatpush.msra.mxu0 %v1169
        %1291 = vmatpush.msra.mxu0 %v1167
        %1292 = vmatpush.msra.mxu0 %v1165
        %1293 = vmatpush.msra.mxu0 %v1163
        %1294 = vmatpush.msra.mxu0 %v1161
        %1295 = vmatpush.msra.mxu0 %v1159
        %1296 = vmatmul.f32.gmra.mxu0 %v1276
        %v1297 = vpop.f32.mrf.mxu0
        %v1298 = vadd.f32 %v1248, %v1297
        %1299 = vmatmul.f32.gmra.mxu0 %v1278
        %v1300 = vpop.f32.mrf.mxu0
        %v1301 = vadd.f32 %v1251, %v1300
        %1302 = vdwg.mxu0
        %1303 = vmatpush.msra.mxu0 0.0
        %1304 = vmatpush.msra.mxu0 %v1188
        %1305 = vmatpush.msra.mxu0 %v1186
        %1306 = vmatpush.msra.mxu0 %v1184
        %1307 = vmatpush.msra.mxu0 %v1182
        %1308 = vmatpush.msra.mxu0 %v1180
        %1309 = vmatpush.msra.mxu0 %v1178
        %1310 = vmatpush.msra.mxu0 %v1176
        %1311 = vmatpush.msra.mxu0 %v1174
        %1312 = vmatpush.msra.mxu0 %v1172
        %1313 = vmatpush.msra.mxu0 %v1170
        %1314 = vmatpush.msra.mxu0 %v1168
        %1315 = vmatpush.msra.mxu0 %v1166
        %1316 = vmatpush.msra.mxu0 %v1164
        %1317 = vmatpush.msra.mxu0 %v1162
        %1318 = vmatpush.msra.mxu0 %v1160
        %1319 = vmatmul.f32.gmra.mxu0 %v1276
        %v1320 = vpop.f32.mrf.mxu0
        %v1321 = vadd.f32 %v1271, %v1320
        %1322 = vmatmul.f32.gmra.mxu0 %v1278
        %v1323 = vpop.f32.mrf.mxu0
        %v1324 = vadd.f32 %v1274, %v1323
        %1325 = vdwg.mxu0
        %s1326 = scalar_lea.vmem %s7, 480
        %v1327 = vld [vmem:[%s1326] sm:$0xff]
        %v1328 = vld [vmem:[%s1326 + $0x8] sm:$0xff]
        %v1329 = vld [vmem:[%s1326 + $0x10] sm:$0xff]
        %v1330 = vld [vmem:[%s1326 + $0x18] sm:$0xff]
        %v1331 = vld [vmem:[%s1326 + $0x20] sm:$0xff]
        %v1332 = vld [vmem:[%s1326 + $0x28] sm:$0xff]
        %v1333 = vld [vmem:[%s1326 + $0x30] sm:$0xff]
        %v1334 = vld [vmem:[%s1326 + $0x38] sm:$0xff]
        %v1335 = vld [vmem:[%s1326 + $0x40] sm:$0xff]
        %v1336 = vld [vmem:[%s1326 + $0x48] sm:$0xff]
        %v1337 = vld [vmem:[%s1326 + $0x50] sm:$0xff]
        %v1338 = vld [vmem:[%s1326 + $0x58] sm:$0xff]
        %v1339 = vld [vmem:[%s1326 + $0x60] sm:$0xff]
        %v1340 = vld [vmem:[%s1326 + $0x68] sm:$0xff]
        %v1341 = vld [vmem:[%s1326 + $0x70] sm:$0xff]
        %v1342 = vld [vmem:[%s1326 + $0x78] sm:$0xff]
        %v1343 = vld [vmem:[%s1326 + $0x80] sm:$0xff]
        %v1344 = vld [vmem:[%s1326 + $0x88] sm:$0xff]
        %v1345 = vld [vmem:[%s1326 + $0x90] sm:$0xff]
        %v1346 = vld [vmem:[%s1326 + $0x98] sm:$0xff]
        %v1347 = vld [vmem:[%s1326 + $0xa0] sm:$0xff]
        %v1348 = vld [vmem:[%s1326 + $0xa8] sm:$0xff]
        %v1349 = vld [vmem:[%s1326 + $0xb0] sm:$0xff]
        %v1350 = vld [vmem:[%s1326 + $0xb8] sm:$0xff]
        %v1351 = vld [vmem:[%s1326 + $0xc0] sm:$0xff]
        %v1352 = vld [vmem:[%s1326 + $0xc8] sm:$0xff]
        %v1353 = vld [vmem:[%s1326 + $0xd0] sm:$0xff]
        %v1354 = vld [vmem:[%s1326 + $0xd8] sm:$0xff]
        %v1355 = vld [vmem:[%s1326 + $0xe0] sm:$0xff]
        %v1356 = vld [vmem:[%s1326 + $0xe8] sm:$0xff]
        %v1357 = vrot.slane %v1157, 2
        %v1358 = vrot.slane %v1158, 2
        %v1359 = vsel %vm775, %v1357, %v1358
        %v1360 = vsel %vm1225, %v1359, 0
        %v1362 = vsel %vm1225, %v1358, 0
        %1364 = vmatpush.msra.mxu0 0.0
        %1365 = vmatpush.msra.mxu0 %v1355
        %1366 = vmatpush.msra.mxu0 %v1353
        %1367 = vmatpush.msra.mxu0 %v1351
        %1368 = vmatpush.msra.mxu0 %v1349
        %1369 = vmatpush.msra.mxu0 %v1347
        %1370 = vmatpush.msra.mxu0 %v1345
        %1371 = vmatpush.msra.mxu0 %v1343
        %1372 = vmatpush.msra.mxu0 %v1341
        %1373 = vmatpush.msra.mxu0 %v1339
        %1374 = vmatpush.msra.mxu0 %v1337
        %1375 = vmatpush.msra.mxu0 %v1335
        %1376 = vmatpush.msra.mxu0 %v1333
        %1377 = vmatpush.msra.mxu0 %v1331
        %1378 = vmatpush.msra.mxu0 %v1329
        %1379 = vmatpush.msra.mxu0 %v1327
        %1380 = vmatmul.f32.gmra.mxu0 %v1360
        %v1381 = vpop.f32.mrf.mxu0
        %v1382 = vadd.f32 0.0, %v1381
        %1383 = vmatmul.f32.gmra.mxu0 %v1362
        %v1384 = vpop.f32.mrf.mxu0
        %v1385 = vadd.f32 0.0, %v1384
        %1386 = vdwg.mxu0
        %1387 = vmatpush.msra.mxu0 0.0
        %1388 = vmatpush.msra.mxu0 %v1356
        %1389 = vmatpush.msra.mxu0 %v1354
        %1390 = vmatpush.msra.mxu0 %v1352
        %1391 = vmatpush.msra.mxu0 %v1350
        %1392 = vmatpush.msra.mxu0 %v1348
        %1393 = vmatpush.msra.mxu0 %v1346
        %1394 = vmatpush.msra.mxu0 %v1344
        %1395 = vmatpush.msra.mxu0 %v1342
        %1396 = vmatpush.msra.mxu0 %v1340
        %1397 = vmatpush.msra.mxu0 %v1338
        %1398 = vmatpush.msra.mxu0 %v1336
        %1399 = vmatpush.msra.mxu0 %v1334
        %1400 = vmatpush.msra.mxu0 %v1332
        %1401 = vmatpush.msra.mxu0 %v1330
        %1402 = vmatpush.msra.mxu0 %v1328
        %1403 = vmatmul.f32.gmra.mxu0 %v1360
        %v1404 = vpop.f32.mrf.mxu0
        %v1405 = vadd.f32 0.0, %v1404
        %1406 = vmatmul.f32.gmra.mxu0 %v1362
        %v1407 = vpop.f32.mrf.mxu0
        %v1408 = vadd.f32 0.0, %v1407
        %1409 = vdwg.mxu0
        %v1410 = vadd.f32 %v1298, %v1382
        %v1411 = vadd.f32 %v1321, %v1405
        %v1412 = vadd.f32 %v1301, %v1385
        %v1413 = vadd.f32 %v1324, %v1408
        %v1414 = vld [vmem:[%s8] sm:$0x3]
        %v1416 = vperm.slane %v1414, 0
        %v1417 = vperm.slane %v1414, 1
        %v1420 = vadd.f32 %v1410, %v1416
        %v1421 = vadd.f32 %v1411, %v1417
        %v1422 = vadd.f32 %v1412, %v1416
        %v1423 = vadd.f32 %v1413, %v1417
        %v1424 = vmax.f32 %v1420, 0.0
        %v1425 = vmax.f32 %v1421, 0.0
        %v1426 = vmax.f32 %v1422, 0.0
        %v1427 = vmax.f32 %v1423, 0.0
        %v1428 = vld [vmem:[%s9] sm:$0x3f]
        %vm1429 = vcmask 105472
        %v1431 = vsel %vm1429, %v1428, 0
        %vm1433 = vcmask 1044480
        %v1435 = vsel %vm1433, %v1426, 0
        %v1438 = vsel %vm1433, %v1427, 0
        %1440 = vmatpush.msra.mxu0 0.0
        %1441 = vmatpush.msra.mxu0 0.0
        %1442 = vmatpush.msra.mxu0 0.0
        %1443 = vmatpush.msra.mxu0 0.0
        %1444 = vmatpush.msra.mxu0 0.0
        %1445 = vmatpush.msra.mxu0 0.0
        %1446 = vmatpush.msra.mxu0 0.0
        %1447 = vmatpush.msra.mxu0 0.0
        %1448 = vmatpush.msra.mxu0 0.0
        %1449 = vmatpush.msra.mxu0 0.0
        %1450 = vmatpush.msra.mxu0 0.0
        %1451 = vmatpush.msra.mxu0 0.0
        %1452 = vmatpush.msra.mxu0 0.0
        %1453 = vmatpush.msra.mxu0 0.0
        %1454 = vmatpush.msra.mxu0 %v1435
        %1455 = vmatpush.msra.mxu0 %v1424
        %1456 = vmatmul.f32.gmra.mxu0 %v1431
        %v1457 = vpop.f32.mrf.mxu0
        %v1458 = vadd.f32 0.0, %v1457
        %1459 = vdwg.mxu0
        %1460 = vmatpush.msra.mxu0 0.0
        %1461 = vmatpush.msra.mxu0 0.0
        %1462 = vmatpush.msra.mxu0 0.0
        %1463 = vmatpush.msra.mxu0 0.0
        %1464 = vmatpush.msra.mxu0 0.0
        %1465 = vmatpush.msra.mxu0 0.0
        %1466 = vmatpush.msra.mxu0 0.0
        %1467 = vmatpush.msra.mxu0 0.0
        %1468 = vmatpush.msra.mxu0 0.0
        %1469 = vmatpush.msra.mxu0 0.0
        %1470 = vmatpush.msra.mxu0 0.0
        %1471 = vmatpush.msra.mxu0 0.0
        %1472 = vmatpush.msra.mxu0 0.0
        %1473 = vmatpush.msra.mxu0 0.0
        %1474 = vmatpush.msra.mxu0 %v1438
        %1475 = vmatpush.msra.mxu0 %v1425
        %1476 = vmatmul.f32.gmra.mxu0 %v1431
        %v1477 = vpop.f32.mrf.mxu0
        %v1478 = vadd.f32 0.0, %v1477
        %1479 = vdwg.mxu0
        %v1480 = vld [vmem:[%s10] sm:$0x3f]
        %v1482 = vsel %vm1429, %v1480, 0
        %1484 = vmatpush.msra.mxu0 0.0
        %1485 = vmatpush.msra.mxu0 0.0
        %1486 = vmatpush.msra.mxu0 0.0
        %1487 = vmatpush.msra.mxu0 0.0
        %1488 = vmatpush.msra.mxu0 0.0
        %1489 = vmatpush.msra.mxu0 0.0
        %1490 = vmatpush.msra.mxu0 0.0
        %1491 = vmatpush.msra.mxu0 0.0
        %1492 = vmatpush.msra.mxu0 0.0
        %1493 = vmatpush.msra.mxu0 0.0
        %1494 = vmatpush.msra.mxu0 0.0
        %1495 = vmatpush.msra.mxu0 0.0
        %1496 = vmatpush.msra.mxu0 0.0
        %1497 = vmatpush.msra.mxu0 0.0
        %1498 = vmatpush.msra.mxu0 %v1435
        %1499 = vmatpush.msra.mxu0 %v1424
        %1500 = vmatmul.f32.gmra.mxu0 %v1482
        %v1501 = vpop.f32.mrf.mxu0
        %v1502 = vadd.f32 0.0, %v1501
        %1503 = vdwg.mxu0
        %1504 = vmatpush.msra.mxu0 0.0
        %1505 = vmatpush.msra.mxu0 0.0
        %1506 = vmatpush.msra.mxu0 0.0
        %1507 = vmatpush.msra.mxu0 0.0
        %1508 = vmatpush.msra.mxu0 0.0
        %1509 = vmatpush.msra.mxu0 0.0
        %1510 = vmatpush.msra.mxu0 0.0
        %1511 = vmatpush.msra.mxu0 0.0
        %1512 = vmatpush.msra.mxu0 0.0
        %1513 = vmatpush.msra.mxu0 0.0
        %1514 = vmatpush.msra.mxu0 0.0
        %1515 = vmatpush.msra.mxu0 0.0
        %1516 = vmatpush.msra.mxu0 0.0
        %1517 = vmatpush.msra.mxu0 0.0
        %1518 = vmatpush.msra.mxu0 %v1438
        %1519 = vmatpush.msra.mxu0 %v1425
        %1520 = vmatmul.f32.gmra.mxu0 %v1482
        %v1521 = vpop.f32.mrf.mxu0
        %v1522 = vadd.f32 0.0, %v1521
        %1523 = vdwg.mxu0
        %v1524 = vmax.f32 %v1458, %v1502
        %v1525 = vmax.f32 %v1478, %v1522
        %v1526 = vld [vmem:[%s11] sm:$0xff]
        %v1527 = vld [vmem:[%s11 + $0x8] sm:$0xff]
        %v1528 = vld [vmem:[%s11 + $0x10] sm:$0xff]
        %v1529 = vld [vmem:[%s11 + $0x18] sm:$0xff]
        %v1530 = vld [vmem:[%s11 + $0x20] sm:$0xff]
        %v1531 = vld [vmem:[%s11 + $0x28] sm:$0xff]
        %v1532 = vld [vmem:[%s11 + $0x30] sm:$0xff]
        %v1533 = vld [vmem:[%s11 + $0x38] sm:$0xff]
        %v1534 = vld [vmem:[%s11 + $0x40] sm:$0xff]
        %v1535 = vld [vmem:[%s11 + $0x48] sm:$0xff]
        %v1536 = vld [vmem:[%s11 + $0x50] sm:$0xff]
        %v1537 = vld [vmem:[%s11 + $0x58] sm:$0xff]
        %v1538 = vld [vmem:[%s11 + $0x60] sm:$0xff]
        %v1539 = vld [vmem:[%s11 + $0x68] sm:$0xff]
        %v1540 = vld [vmem:[%s11 + $0x70] sm:$0xff]
        %v1541 = vld [vmem:[%s11 + $0x78] sm:$0xff]
        %v1542 = vld [vmem:[%s11 + $0x80] sm:$0xff]
        %v1543 = vld [vmem:[%s11 + $0x88] sm:$0xff]
        %v1544 = vld [vmem:[%s11 + $0x90] sm:$0xff]
        %v1545 = vld [vmem:[%s11 + $0x98] sm:$0xff]
        %v1546 = vld [vmem:[%s11 + $0xa0] sm:$0xff]
        %v1547 = vld [vmem:[%s11 + $0xa8] sm:$0xff]
        %v1548 = vld [vmem:[%s11 + $0xb0] sm:$0xff]
        %v1549 = vld [vmem:[%s11 + $0xb8] sm:$0xff]
        %v1550 = vld [vmem:[%s11 + $0xc0] sm:$0xff]
        %v1551 = vld [vmem:[%s11 + $0xc8] sm:$0xff]
        %vm1552 = vcmask 654336
        %v1554 = vsel %vm1552, %v1525, 0
        %1556 = vmatpush.msra.mxu0 %v1541
        %1557 = vmatpush.msra.mxu0 %v1540
        %1558 = vmatpush.msra.mxu0 %v1539
        %1559 = vmatpush.msra.mxu0 %v1538
        %1560 = vmatpush.msra.mxu0 %v1537
        %1561 = vmatpush.msra.mxu0 %v1536
        %1562 = vmatpush.msra.mxu0 %v1535
        %1563 = vmatpush.msra.mxu0 %v1534
        %1564 = vmatpush.msra.mxu0 %v1533
        %1565 = vmatpush.msra.mxu0 %v1532
        %1566 = vmatpush.msra.mxu0 %v1531
        %1567 = vmatpush.msra.mxu0 %v1530
        %1568 = vmatpush.msra.mxu0 %v1529
        %1569 = vmatpush.msra.mxu0 %v1528
        %1570 = vmatpush.msra.mxu0 %v1527
        %1571 = vmatpush.msra.mxu0 %v1526
        %1572 = vmatmul.f32.gmra.mxu0 %v1524
        %v1573 = vpop.f32.mrf.mxu0
        %v1574 = vadd.f32 0.0, %v1573
        %1575 = vdwg.mxu0
        %1576 = vmatpush.msra.mxu0 0.0
        %1577 = vmatpush.msra.mxu0 0.0
        %1578 = vmatpush.msra.mxu0 0.0
        %1579 = vmatpush.msra.mxu0 0.0
        %1580 = vmatpush.msra.mxu0 0.0
        %1581 = vmatpush.msra.mxu0 0.0
        %1582 = vmatpush.msra.mxu0 %v1551
        %1583 = vmatpush.msra.mxu0 %v1550
        %1584 = vmatpush.msra.mxu0 %v1549
        %1585 = vmatpush.msra.mxu0 %v1548
        %1586 = vmatpush.msra.mxu0 %v1547
        %1587 = vmatpush.msra.mxu0 %v1546
        %1588 = vmatpush.msra.mxu0 %v1545
        %1589 = vmatpush.msra.mxu0 %v1544
        %1590 = vmatpush.msra.mxu0 %v1543
        %1591 = vmatpush.msra.mxu0 %v1542
        %1592 = vmatmul.f32.gmra.mxu0 %v1554
        %v1593 = vpop.f32.mrf.mxu0
        %v1594 = vadd.f32 %v1574, %v1593
        %1595 = vdwg.mxu0
        %v1596 = vld [vmem:[%s12] sm:$0xff]
        %v1597 = vld [vmem:[%s12 + $0x8] sm:$0xff]
        %v1598 = vld [vmem:[%s12 + $0x10] sm:$0xff]
        %v1599 = vld [vmem:[%s12 + $0x18] sm:$0xff]
        %v1600 = vld [vmem:[%s12 + $0x20] sm:$0xff]
        %v1601 = vld [vmem:[%s12 + $0x28] sm:$0xff]
        %v1602 = vld [vmem:[%s12 + $0x30] sm:$0xff]
        %v1603 = vld [vmem:[%s12 + $0x38] sm:$0xff]
        %v1604 = vld [vmem:[%s12 + $0x40] sm:$0xff]
        %v1605 = vld [vmem:[%s12 + $0x48] sm:$0xff]
        %v1606 = vld [vmem:[%s12 + $0x50] sm:$0xff]
        %v1607 = vld [vmem:[%s12 + $0x58] sm:$0xff]
        %v1608 = vld [vmem:[%s12 + $0x60] sm:$0xff]
        %v1609 = vld [vmem:[%s12 + $0x68] sm:$0xff]
        %v1610 = vld [vmem:[%s12 + $0x70] sm:$0xff]
        %v1611 = vld [vmem:[%s12 + $0x78] sm:$0xff]
        %v1612 = vld [vmem:[%s12 + $0x80] sm:$0xff]
        %v1613 = vld [vmem:[%s12 + $0x88] sm:$0xff]
        %v1614 = vld [vmem:[%s12 + $0x90] sm:$0xff]
        %v1615 = vld [vmem:[%s12 + $0x98] sm:$0xff]
        %v1616 = vld [vmem:[%s12 + $0xa0] sm:$0xff]
        %v1617 = vld [vmem:[%s12 + $0xa8] sm:$0xff]
        %v1618 = vld [vmem:[%s12 + $0xb0] sm:$0xff]
        %v1619 = vld [vmem:[%s12 + $0xb8] sm:$0xff]
        %v1620 = vld [vmem:[%s12 + $0xc0] sm:$0xff]
        %v1621 = vld [vmem:[%s12 + $0xc8] sm:$0xff]
        %1622 = vmatpush.msra.mxu0 %v1611
        %1623 = vmatpush.msra.mxu0 %v1610
        %1624 = vmatpush.msra.mxu0 %v1609
        %1625 = vmatpush.msra.mxu0 %v1608
        %1626 = vmatpush.msra.mxu0 %v1607
        %1627 = vmatpush.msra.mxu0 %v1606
        %1628 = vmatpush.msra.mxu0 %v1605
        %1629 = vmatpush.msra.mxu0 %v1604
        %1630 = vmatpush.msra.mxu0 %v1603
        %1631 = vmatpush.msra.mxu0 %v1602
        %1632 = vmatpush.msra.mxu0 %v1601
        %1633 = vmatpush.msra.mxu0 %v1600
        %1634 = vmatpush.msra.mxu0 %v1599
        %1635 = vmatpush.msra.mxu0 %v1598
        %1636 = vmatpush.msra.mxu0 %v1597
        %1637 = vmatpush.msra.mxu0 %v1596
        %1638 = vmatmul.f32.gmra.mxu0 %v1524
        %v1639 = vpop.f32.mrf.mxu0
        %v1640 = vadd.f32 0.0, %v1639
        %1641 = vdwg.mxu0
        %1642 = vmatpush.msra.mxu0 0.0
        %1643 = vmatpush.msra.mxu0 0.0
        %1644 = vmatpush.msra.mxu0 0.0
        %1645 = vmatpush.msra.mxu0 0.0
        %1646 = vmatpush.msra.mxu0 0.0
        %1647 = vmatpush.msra.mxu0 0.0
        %1648 = vmatpush.msra.mxu0 %v1621
        %1649 = vmatpush.msra.mxu0 %v1620
        %1650 = vmatpush.msra.mxu0 %v1619
        %1651 = vmatpush.msra.mxu0 %v1618
        %1652 = vmatpush.msra.mxu0 %v1617
        %1653 = vmatpush.msra.mxu0 %v1616
        %1654 = vmatpush.msra.mxu0 %v1615
        %1655 = vmatpush.msra.mxu0 %v1614
        %1656 = vmatpush.msra.mxu0 %v1613
        %1657 = vmatpush.msra.mxu0 %v1612
        %1658 = vmatmul.f32.gmra.mxu0 %v1554
        %v1659 = vpop.f32.mrf.mxu0
        %v1660 = vadd.f32 %v1640, %v1659
        %1661 = vdwg.mxu0
        %v1662 = vmax.f32 %v1594, %v1660
        %v1663 = vld [vmem:[%s14] sm:$0x1]
        %v1664 = vld [vmem:[%s13] sm:$0xff]
        %v1665 = vld [vmem:[%s13 + $0x8] sm:$0xff]
        %v1666 = vld [vmem:[%s13 + $0x10] sm:$0xff]
        %v1667 = vld [vmem:[%s13 + $0x18] sm:$0xff]
        %v1668 = vld [vmem:[%s13 + $0x20] sm:$0xff]
        %v1669 = vld [vmem:[%s13 + $0x28] sm:$0xff]
        %v1670 = vld [vmem:[%s13 + $0x30] sm:$0xff]
        %v1671 = vld [vmem:[%s13 + $0x38] sm:$0xff]
        %v1672 = vld [vmem:[%s13 + $0x40] sm:$0xff]
        %v1673 = vld [vmem:[%s13 + $0x48] sm:$0xff]
        %v1674 = vld [vmem:[%s13 + $0x50] sm:$0xff]
        %v1675 = vld [vmem:[%s13 + $0x58] sm:$0xff]
        %vm1676 = vcmask 785408
        %v1678 = vsel %vm1676, %v1662, 0
        %1680 = vmatpush.msra.mxu0 0.0
        %1681 = vmatpush.msra.mxu0 0.0
        %1682 = vmatpush.msra.mxu0 0.0
        %1683 = vmatpush.msra.mxu0 0.0
        %1684 = vmatpush.msra.mxu0 %v1675
        %1685 = vmatpush.msra.mxu0 %v1674
        %1686 = vmatpush.msra.mxu0 %v1673
        %1687 = vmatpush.msra.mxu0 %v1672
        %1688 = vmatpush.msra.mxu0 %v1671
        %1689 = vmatpush.msra.mxu0 %v1670
        %1690 = vmatpush.msra.mxu0 %v1669
        %1691 = vmatpush.msra.mxu0 %v1668
        %1692 = vmatpush.msra.mxu0 %v1667
        %1693 = vmatpush.msra.mxu0 %v1666
        %1694 = vmatpush.msra.mxu0 %v1665
        %1695 = vmatpush.msra.mxu0 %v1664
        %1696 = vmatmul.f32.gmra.mxu0 %v1678
        %v1697 = vpop.f32.mrf.mxu0
        %v1698 = vadd.f32 0.0, %v1697
        %1699 = vdwg.mxu0
        %v1700 = vadd.f32 %v1663, %v1698
        %s1701 = scalar_lea.vmem %s13, 96
        %v1702 = vld [vmem:[%s1701] sm:$0xff]
        %v1703 = vld [vmem:[%s1701 + $0x8] sm:$0xff]
        %v1704 = vld [vmem:[%s1701 + $0x10] sm:$0xff]
        %v1705 = vld [vmem:[%s1701 + $0x18] sm:$0xff]
        %v1706 = vld [vmem:[%s1701 + $0x20] sm:$0xff]
        %v1707 = vld [vmem:[%s1701 + $0x28] sm:$0xff]
        %v1708 = vld [vmem:[%s1701 + $0x30] sm:$0xff]
        %v1709 = vld [vmem:[%s1701 + $0x38] sm:$0xff]
        %v1710 = vld [vmem:[%s1701 + $0x40] sm:$0xff]
        %v1711 = vld [vmem:[%s1701 + $0x48] sm:$0xff]
        %v1712 = vld [vmem:[%s1701 + $0x50] sm:$0xff]
        %v1713 = vld [vmem:[%s1701 + $0x58] sm:$0xff]
        %v1714 = vrot.slane %v1662, 1
        %v1715 = vsel %vm1676, %v1714, 0
        %1717 = vmatpush.msra.mxu0 0.0
        %1718 = vmatpush.msra.mxu0 0.0
        %1719 = vmatpush.msra.mxu0 0.0
        %1720 = vmatpush.msra.mxu0 0.0
        %1721 = vmatpush.msra.mxu0 %v1713
        %1722 = vmatpush.msra.mxu0 %v1712
        %1723 = vmatpush.msra.mxu0 %v1711
        %1724 = vmatpush.msra.mxu0 %v1710
        %1725 = vmatpush.msra.mxu0 %v1709
        %1726 = vmatpush.msra.mxu0 %v1708
        %1727 = vmatpush.msra.mxu0 %v1707
        %1728 = vmatpush.msra.mxu0 %v1706
        %1729 = vmatpush.msra.mxu0 %v1705
        %1730 = vmatpush.msra.mxu0 %v1704
        %1731 = vmatpush.msra.mxu0 %v1703
        %1732 = vmatpush.msra.mxu0 %v1702
        %1733 = vmatmul.f32.gmra.mxu0 %v1715
        %v1734 = vpop.f32.mrf.mxu0
        %v1735 = vadd.f32 0.0, %v1734
        %1736 = vdwg.mxu0
        %v1737 = vadd.f32 %v1700, %v1735
        %s1738 = scalar_lea.vmem %s13, 192
        %v1739 = vld [vmem:[%s1738] sm:$0xff]
        %v1740 = vld [vmem:[%s1738 + $0x8] sm:$0xff]
        %v1741 = vld [vmem:[%s1738 + $0x10] sm:$0xff]
        %v1742 = vld [vmem:[%s1738 + $0x18] sm:$0xff]
        %v1743 = vld [vmem:[%s1738 + $0x20] sm:$0xff]
        %v1744 = vld [vmem:[%s1738 + $0x28] sm:$0xff]
        %v1745 = vld [vmem:[%s1738 + $0x30] sm:$0xff]
        %v1746 = vld [vmem:[%s1738 + $0x38] sm:$0xff]
        %v1747 = vld [vmem:[%s1738 + $0x40] sm:$0xff]
        %v1748 = vld [vmem:[%s1738 + $0x48] sm:$0xff]
        %v1749 = vld [vmem:[%s1738 + $0x50] sm:$0xff]
        %v1750 = vld [vmem:[%s1738 + $0x58] sm:$0xff]
        %v1751 = vrot.slane %v1662, 2
        %v1752 = vsel %vm1676, %v1751, 0
        %1754 = vmatpush.msra.mxu0 0.0
        %1755 = vmatpush.msra.mxu0 0.0
        %1756 = vmatpush.msra.mxu0 0.0
        %1757 = vmatpush.msra.mxu0 0.0
        %1758 = vmatpush.msra.mxu0 %v1750
        %1759 = vmatpush.msra.mxu0 %v1749
        %1760 = vmatpush.msra.mxu0 %v1748
        %1761 = vmatpush.msra.mxu0 %v1747
        %1762 = vmatpush.msra.mxu0 %v1746
        %1763 = vmatpush.msra.mxu0 %v1745
        %1764 = vmatpush.msra.mxu0 %v1744
        %1765 = vmatpush.msra.mxu0 %v1743
        %1766 = vmatpush.msra.mxu0 %v1742
        %1767 = vmatpush.msra.mxu0 %v1741
        %1768 = vmatpush.msra.mxu0 %v1740
        %1769 = vmatpush.msra.mxu0 %v1739
        %1770 = vmatmul.f32.gmra.mxu0 %v1752
        %v1771 = vpop.f32.mrf.mxu0
        %v1772 = vadd.f32 0.0, %v1771
        %1773 = vdwg.mxu0
        %v1774 = vadd.f32 %v1737, %v1772
        %s1775 = scalar_lea.vmem %s13, 288
        %v1776 = vld [vmem:[%s1775] sm:$0xff]
        %v1777 = vld [vmem:[%s1775 + $0x8] sm:$0xff]
        %v1778 = vld [vmem:[%s1775 + $0x10] sm:$0xff]
        %v1779 = vld [vmem:[%s1775 + $0x18] sm:$0xff]
        %v1780 = vld [vmem:[%s1775 + $0x20] sm:$0xff]
        %v1781 = vld [vmem:[%s1775 + $0x28] sm:$0xff]
        %v1782 = vld [vmem:[%s1775 + $0x30] sm:$0xff]
        %v1783 = vld [vmem:[%s1775 + $0x38] sm:$0xff]
        %v1784 = vld [vmem:[%s1775 + $0x40] sm:$0xff]
        %v1785 = vld [vmem:[%s1775 + $0x48] sm:$0xff]
        %v1786 = vld [vmem:[%s1775 + $0x50] sm:$0xff]
        %v1787 = vld [vmem:[%s1775 + $0x58] sm:$0xff]
        %v1788 = vrot.slane %v1662, 3
        %v1789 = vsel %vm1676, %v1788, 0
        %1791 = vmatpush.msra.mxu0 0.0
        %1792 = vmatpush.msra.mxu0 0.0
        %1793 = vmatpush.msra.mxu0 0.0
        %1794 = vmatpush.msra.mxu0 0.0
        %1795 = vmatpush.msra.mxu0 %v1787
        %1796 = vmatpush.msra.mxu0 %v1786
        %1797 = vmatpush.msra.mxu0 %v1785
        %1798 = vmatpush.msra.mxu0 %v1784
        %1799 = vmatpush.msra.mxu0 %v1783
        %1800 = vmatpush.msra.mxu0 %v1782
        %1801 = vmatpush.msra.mxu0 %v1781
        %1802 = vmatpush.msra.mxu0 %v1780
        %1803 = vmatpush.msra.mxu0 %v1779
        %1804 = vmatpush.msra.mxu0 %v1778
        %1805 = vmatpush.msra.mxu0 %v1777
        %1806 = vmatpush.msra.mxu0 %v1776
        %1807 = vmatmul.f32.gmra.mxu0 %v1789
        %v1808 = vpop.f32.mrf.mxu0
        %v1809 = vadd.f32 0.0, %v1808
        %1810 = vdwg.mxu0
        %v1811 = vadd.f32 %v1774, %v1809
        %s1812 = scalar_lea.vmem %s13, 384
        %v1813 = vld [vmem:[%s1812] sm:$0xff]
        %v1814 = vld [vmem:[%s1812 + $0x8] sm:$0xff]
        %v1815 = vld [vmem:[%s1812 + $0x10] sm:$0xff]
        %v1816 = vld [vmem:[%s1812 + $0x18] sm:$0xff]
        %v1817 = vld [vmem:[%s1812 + $0x20] sm:$0xff]
        %v1818 = vld [vmem:[%s1812 + $0x28] sm:$0xff]
        %v1819 = vld [vmem:[%s1812 + $0x30] sm:$0xff]
        %v1820 = vld [vmem:[%s1812 + $0x38] sm:$0xff]
        %v1821 = vld [vmem:[%s1812 + $0x40] sm:$0xff]
        %v1822 = vld [vmem:[%s1812 + $0x48] sm:$0xff]
        %v1823 = vld [vmem:[%s1812 + $0x50] sm:$0xff]
        %v1824 = vld [vmem:[%s1812 + $0x58] sm:$0xff]
        %v1825 = vrot.slane %v1662, 4
        %v1826 = vsel %vm1676, %v1825, 0
        %1828 = vmatpush.msra.mxu0 0.0
        %1829 = vmatpush.msra.mxu0 0.0
        %1830 = vmatpush.msra.mxu0 0.0
        %1831 = vmatpush.msra.mxu0 0.0
        %1832 = vmatpush.msra.mxu0 %v1824
        %1833 = vmatpush.msra.mxu0 %v1823
        %1834 = vmatpush.msra.mxu0 %v1822
        %1835 = vmatpush.msra.mxu0 %v1821
        %1836 = vmatpush.msra.mxu0 %v1820
        %1837 = vmatpush.msra.mxu0 %v1819
        %1838 = vmatpush.msra.mxu0 %v1818
        %1839 = vmatpush.msra.mxu0 %v1817
        %1840 = vmatpush.msra.mxu0 %v1816
        %1841 = vmatpush.msra.mxu0 %v1815
        %1842 = vmatpush.msra.mxu0 %v1814
        %1843 = vmatpush.msra.mxu0 %v1813
        %1844 = vmatmul.f32.gmra.mxu0 %v1826
        %v1845 = vpop.f32.mrf.mxu0
        %v1846 = vadd.f32 0.0, %v1845
        %1847 = vdwg.mxu0
        %v1848 = vadd.f32 %v1811, %v1846
        %s1849 = scalar_lea.vmem %s13, 480
        %v1850 = vld [vmem:[%s1849] sm:$0xff]
        %v1851 = vld [vmem:[%s1849 + $0x8] sm:$0xff]
        %v1852 = vld [vmem:[%s1849 + $0x10] sm:$0xff]
        %v1853 = vld [vmem:[%s1849 + $0x18] sm:$0xff]
        %v1854 = vld [vmem:[%s1849 + $0x20] sm:$0xff]
        %v1855 = vld [vmem:[%s1849 + $0x28] sm:$0xff]
        %v1856 = vld [vmem:[%s1849 + $0x30] sm:$0xff]
        %v1857 = vld [vmem:[%s1849 + $0x38] sm:$0xff]
        %v1858 = vld [vmem:[%s1849 + $0x40] sm:$0xff]
        %v1859 = vld [vmem:[%s1849 + $0x48] sm:$0xff]
        %v1860 = vld [vmem:[%s1849 + $0x50] sm:$0xff]
        %v1861 = vld [vmem:[%s1849 + $0x58] sm:$0xff]
        %v1862 = vrot.slane %v1662, 5
        %v1863 = vsel %vm1676, %v1862, 0
        %1865 = vmatpush.msra.mxu0 0.0
        %1866 = vmatpush.msra.mxu0 0.0
        %1867 = vmatpush.msra.mxu0 0.0
        %1868 = vmatpush.msra.mxu0 0.0
        %1869 = vmatpush.msra.mxu0 %v1861
        %1870 = vmatpush.msra.mxu0 %v1860
        %1871 = vmatpush.msra.mxu0 %v1859
        %1872 = vmatpush.msra.mxu0 %v1858
        %1873 = vmatpush.msra.mxu0 %v1857
        %1874 = vmatpush.msra.mxu0 %v1856
        %1875 = vmatpush.msra.mxu0 %v1855
        %1876 = vmatpush.msra.mxu0 %v1854
        %1877 = vmatpush.msra.mxu0 %v1853
        %1878 = vmatpush.msra.mxu0 %v1852
        %1879 = vmatpush.msra.mxu0 %v1851
        %1880 = vmatpush.msra.mxu0 %v1850
        %1881 = vmatmul.f32.gmra.mxu0 %v1863
        %v1882 = vpop.f32.mrf.mxu0
        %v1883 = vadd.f32 0.0, %v1882
        %1884 = vdwg.mxu0
        %v1885 = vadd.f32 %v1848, %v1883
        %v1886 = vmax.f32 %v1885, 0.0
        %v1887 = vld [vmem:[%s15] sm:$0xff]
        %v1888 = vld [vmem:[%s15 + $0x8] sm:$0xff]
        %v1889 = vld [vmem:[%s15 + $0x10] sm:$0xff]
        %v1890 = vld [vmem:[%s15 + $0x18] sm:$0xff]
        %v1891 = vld [vmem:[%s15 + $0x20] sm:$0xff]
        %v1892 = vld [vmem:[%s15 + $0x28] sm:$0xff]
        %v1893 = vld [vmem:[%s15 + $0x30] sm:$0xff]
        %v1894 = vld [vmem:[%s15 + $0x38] sm:$0xff]
        %v1895 = vld [vmem:[%s15 + $0x40] sm:$0xff]
        %v1896 = vld [vmem:[%s15 + $0x48] sm:$0xff]
        %v1897 = vld [vmem:[%s15 + $0x50] sm:$0xff]
        %v1898 = vld [vmem:[%s15 + $0x58] sm:$0xff]
        %v1899 = vld [vmem:[%s15 + $0x60] sm:$0xff]
        %v1900 = vld [vmem:[%s15 + $0x68] sm:$0xff]
        %v1901 = vld [vmem:[%s15 + $0x70] sm:$0xff]
        %v1902 = vld [vmem:[%s15 + $0x78] sm:$0xff]
        %v1903 = vld [vmem:[%s16] sm:$0x1]
        %1904 = vmatpush.msra.mxu0 %v1902
        %1905 = vmatpush.msra.mxu0 %v1901
        %1906 = vmatpush.msra.mxu0 %v1900
        %1907 = vmatpush.msra.mxu0 %v1899
        %1908 = vmatpush.msra.mxu0 %v1898
        %1909 = vmatpush.msra.mxu0 %v1897
        %1910 = vmatpush.msra.mxu0 %v1896
        %1911 = vmatpush.msra.mxu0 %v1895
        %1912 = vmatpush.msra.mxu0 %v1894
        %1913 = vmatpush.msra.mxu0 %v1893
        %1914 = vmatpush.msra.mxu0 %v1892
        %1915 = vmatpush.msra.mxu0 %v1891
        %1916 = vmatpush.msra.mxu0 %v1890
        %1917 = vmatpush.msra.mxu0 %v1889
        %1918 = vmatpush.msra.mxu0 %v1888
        %1919 = vmatpush.msra.mxu0 %v1887
        %1920 = vmatmul.f32.gmra.mxu0 %v1886
        %v1921 = vpop.f32.mrf.mxu0
        %v1922 = vadd.f32 %v1903, %v1921
        %1923 = vdwg.mxu0
        %v1924 = vmax.f32 %v1922, 0.0
        %v1925 = vld [vmem:[%s17] sm:$0xff]
        %v1926 = vld [vmem:[%s17 + $0x8] sm:$0xff]
        %v1927 = vld [vmem:[%s17 + $0x10] sm:$0xff]
        %v1928 = vld [vmem:[%s17 + $0x18] sm:$0xff]
        %v1929 = vld [vmem:[%s17 + $0x20] sm:$0xff]
        %v1930 = vld [vmem:[%s17 + $0x28] sm:$0xff]
        %v1931 = vld [vmem:[%s17 + $0x30] sm:$0xff]
        %v1932 = vld [vmem:[%s17 + $0x38] sm:$0xff]
        %v1933 = vld [vmem:[%s17 + $0x40] sm:$0xff]
        %v1934 = vld [vmem:[%s17 + $0x48] sm:$0xff]
        %v1935 = vld [vmem:[%s17 + $0x50] sm:$0xff]
        %v1936 = vld [vmem:[%s17 + $0x58] sm:$0xff]
        %v1937 = vld [vmem:[%s17 + $0x60] sm:$0xff]
        %v1938 = vld [vmem:[%s17 + $0x68] sm:$0xff]
        %v1939 = vld [vmem:[%s17 + $0x70] sm:$0xff]
        %v1940 = vld [vmem:[%s17 + $0x78] sm:$0xff]
        %v1941 = vld [vmem:[%s18] sm:$0x1]
        %1942 = vmatpush.msra.mxu0 %v1940
        %1943 = vmatpush.msra.mxu0 %v1939
        %1944 = vmatpush.msra.mxu0 %v1938
        %1945 = vmatpush.msra.mxu0 %v1937
        %1946 = vmatpush.msra.mxu0 %v1936
        %1947 = vmatpush.msra.mxu0 %v1935
        %1948 = vmatpush.msra.mxu0 %v1934
        %1949 = vmatpush.msra.mxu0 %v1933
        %1950 = vmatpush.msra.mxu0 %v1932
        %1951 = vmatpush.msra.mxu0 %v1931
        %1952 = vmatpush.msra.mxu0 %v1930
        %1953 = vmatpush.msra.mxu0 %v1929
        %1954 = vmatpush.msra.mxu0 %v1928
        %1955 = vmatpush.msra.mxu0 %v1927
        %1956 = vmatpush.msra.mxu0 %v1926
        %1957 = vmatpush.msra.mxu0 %v1925
        %1958 = vmatmul.f32.gmra.mxu0 %v1924
        %v1959 = vpop.f32.mrf.mxu0
        %v1960 = vadd.f32 %v1941, %v1959
        %1961 = vdwg.mxu0
        %vm1962 = vcmask 73728
        %1963 = vst.msk [vmem:[%s594] sm:$0x1] %vm1962, %v1960
        %s1964 = sand.u32 %s445, 1
        %s1965 = scalar_lea.sflag [#allocation3], %s1964
        %s1966 = sand.u32 %s445, 1
        %s1967 = scalar_lea.vmem [#allocation2], %s1966
        // Predicated region
        $region97: #{net_forward.1} parent=95 // pred_check
          %p1968 = pneg %p455
        $region98: #{net_forward.1} parent=95 // pred_check_branch
          %1970 = sbr.rel (%p1968) target = $region100
        $region99: #{net_forward.1} parent=95 // pred_region
          %1972 = vsyncadd %s1965, 0
          %s1973 = scalar_lea.hbm %s19, %s33
          %s1975 = sshll.u32 %s1967, 4
          %s1976 = int_to_ptr.vmem [resolvable:$true] %s1975
          %s1977 = sshll.u32 %s1973, 4
          %s1978 = int_to_ptr.hbm [resolvable:$true] %s1977
          %1980 = dma.vmem_to_hbm [thread:$0]  %s1976, 16, %s1978, %s1965
        $region100: #{net_forward.1} parent=95 // pred_fallthru
          _
      $region96: #{net_forward.1} parent=5 // pred_fallthru
        _
      %p1981 = scmp.le.s32.totalorder 2, %s28
      // Predicated region
      $region101: #{net_forward.1} parent=5 // pred_check
        %p1982 = pneg %p1981
      $region102: #{net_forward.1} parent=5 // pred_check_branch
        %1984 = sbr.rel (%p1982) target = $region104
      $region103: #{net_forward.1} parent=5 // pred_region
        %s1985 = ssub.s32 %s28, 2
        // Predicated region
        $region105: #{net_forward.1} parent=103 // pred_check
          %p1986 = pneg %p461
        $region106: #{net_forward.1} parent=103 // pred_check_branch
          %1988 = sbr.rel (%p1986) target = $region108
        $region107: #{net_forward.1} parent=103 // pred_region
          %s1989 = sand.u32 %s446, 1
          %s1990 = scalar_lea.sflag [#allocation3], %s1989
          %s1991 = sand.u32 %s446, 1
          %s1992 = scalar_lea.vmem [#allocation2], %s1991
          %1994 = dma.done %s1990, 16
        $region108: #{net_forward.1} parent=103 // pred_fallthru
          _
      $region104: #{net_forward.1} parent=5 // pred_fallthru
        _
    $region6: #{net_forward.1} parent=1 // loop_footer
      %s32 = sadd.s32 1, %s28
    $region7: #{net_forward.1} parent=1 // loop_footer_branch
      %27 = sbr.rel target = $region3
    $region8: #{net_forward.1} parent=1 // loop_exit
      _
    %1995 = vsyncpa [#allocation3], 1
    %s1996 = scalar_lea.sflag [#allocation3], 1
    %1997 = vsyncpa %s1996, 1

</llo_original>
